<compile_context>
chip_gen: v6e
topology: v6e:2x2x1
jax: 0.10.0
libtpu: 0.0.40
codegen_flags: <defaults>
</compile_context>

<pallas_src>
import math

import jax
import jax.numpy as jnp
from jax import lax
from jax.experimental import pallas as pl
from jax.experimental.pallas import tpu as pltpu

# ------------------------- mini-BERT config (small) -------------------------
VOCAB = 100
HIDDEN = 32          # stand-in for 768
N_LAYERS = 2         # stand-in for 12
N_HEADS = 4
HEAD_DIM = HIDDEN // N_HEADS
INTERMEDIATE = 64    # 4 * hidden
MAX_POS = 16
TYPE_VOCAB = 2
LN_EPS = 1e-12
ATTN_SCALE = 1.0 / math.sqrt(HEAD_DIM)


# ------------------------------ shared helpers ------------------------------
def _gelu(y):
    # TODO(synk): HF BERT uses erf-based gelu; tanh approximation used here
    # for a clean TPU EUP lowering.
    return 0.5 * y * (1.0 + jnp.tanh(
        0.7978845608028654 * (y + 0.044715 * y * y * y)))


def _layernorm(h, g, b):
    mean = jnp.mean(h, axis=-1, keepdims=True)
    var = jnp.mean((h - mean) * (h - mean), axis=-1, keepdims=True)
    return (h - mean) * lax.rsqrt(var + LN_EPS) * g + b


# ------------------------------ Pallas kernels ------------------------------
def _ln_kernel(x_ref, g_ref, b_ref, o_ref):
    o_ref[...] = _layernorm(x_ref[...], g_ref[...], b_ref[...])


def layernorm(x, gamma, beta):
    """LayerNorm over the last dim of a [M, N] slab (embedding LN)."""
    M, N = x.shape
    return pl.pallas_call(
        _ln_kernel,
        grid_spec=pltpu.PrefetchScalarGridSpec(
            num_scalar_prefetch=0,
            grid=(1,),
            in_specs=[
                pl.BlockSpec((M, N), lambda i: (0, 0)),
                pl.BlockSpec((1, N), lambda i: (0, 0)),
                pl.BlockSpec((1, N), lambda i: (0, 0)),
            ],
            out_specs=pl.BlockSpec((M, N), lambda i: (0, 0)),
        ),
        out_shape=jax.ShapeDtypeStruct((M, N), jnp.float32),
        compiler_params=pltpu.CompilerParams(dimension_semantics=("arbitrary",)),
    )(x, gamma.reshape(1, N), beta.reshape(1, N))


def _encoder_layer_kernel(x_ref, mbias_ref,
                          wqkv_ref, bqkv_ref, wo_ref, bo_ref,
                          ln1g_ref, ln1b_ref,
                          w1_ref, b1_ref, w2_ref, b2_ref,
                          ln2g_ref, ln2b_ref,
                          o_ref):
    """One whole BERT encoder layer for one batch row (S, HIDDEN)."""
    x = x_ref[...]                                       # (S, H)
    mb = mbias_ref[...]                                  # (1, S) broadcasts over rows

    # fused QKV projection: one MXU pass over the [H, 3H] slab
    qkv = jnp.dot(x, wqkv_ref[...],
                  preferred_element_type=jnp.float32) + bqkv_ref[...]

    # attention; head merge + output projection folded per head:
    #   ctx @ Wo == sum_h ctx_h @ Wo[h*D:(h+1)*D, :]
    acc = x + bo_ref[...]                                # residual + proj bias up front
    for h in range(N_HEADS):                             # unrolled, heads are tiny
        c = h * HEAD_DIM
        q = qkv[:, c:c + HEAD_DIM] * ATTN_SCALE          # scale folded into small q tile
        k = qkv[:, HIDDEN + c:HIDDEN + c + HEAD_DIM]
        v = qkv[:, 2 * HIDDEN + c:2 * HIDDEN + c + HEAD_DIM]
        s = lax.dot_general(q, k, (((1,), (1,)), ((), ())),
                            preferred_element_type=jnp.float32) + mb   # (S, S)
        m = jnp.max(s, axis=-1, keepdims=True)
        p = jnp.exp(s - m)
        l = jnp.sum(p, axis=-1, keepdims=True)
        ctx_h = jnp.dot(p, v, preferred_element_type=jnp.float32) \
            * pl.reciprocal(l, approx=True)              # (S, D)
        acc = acc + jnp.dot(ctx_h, wo_ref[c:c + HEAD_DIM, :],
                            preferred_element_type=jnp.float32)
    x1 = _layernorm(acc, ln1g_ref[...], ln1b_ref[...])

    # feed-forward (gelu) + residual + LayerNorm, all in-register
    inter = _gelu(jnp.dot(x1, w1_ref[...],
                          preferred_element_type=jnp.float32) + b1_ref[...])
    h2 = jnp.dot(inter, w2_ref[...],
                 preferred_element_type=jnp.float32) + b2_ref[...] + x1
    o_ref[...] = _layernorm(h2, ln2g_ref[...], ln2b_ref[...])


def encoder_layer(x, mbias, layer):
    """x: [B, S, HIDDEN], mbias: [B, 1, S] -> [B, S, HIDDEN] (one fused layer)."""
    # TODO(synk): at real BERT-base (S=512, H=768, I=3072) the QKV/FFN matmuls
    # need K/N tiling with f32 accumulators and the attention needs a
    # flash-style kv loop; at this mini config every operand fits in VMEM/vregs.
    B, S, _ = x.shape

    def w_spec(a):
        shape = a.shape
        return pl.BlockSpec(shape, lambda b, _s=shape: (0,) * len(_s))

    weights = (
        layer["wqkv"], layer["bqkv"].reshape(1, -1),
        layer["wo"], layer["bo"].reshape(1, -1),
        layer["ln1_g"].reshape(1, -1), layer["ln1_b"].reshape(1, -1),
        layer["w1"], layer["b1"].reshape(1, -1),
        layer["w2"], layer["b2"].reshape(1, -1),
        layer["ln2_g"].reshape(1, -1), layer["ln2_b"].reshape(1, -1),
    )

    return pl.pallas_call(
        _encoder_layer_kernel,
        grid_spec=pltpu.PrefetchScalarGridSpec(
            num_scalar_prefetch=0,
            grid=(B,),
            in_specs=[
                pl.BlockSpec((None, S, HIDDEN), lambda b: (b, 0, 0)),
                pl.BlockSpec((None, 1, S), lambda b: (b, 0, 0)),
            ] + [w_spec(a) for a in weights],
            out_specs=pl.BlockSpec((None, S, HIDDEN), lambda b: (b, 0, 0)),
        ),
        out_shape=jax.ShapeDtypeStruct((B, S, HIDDEN), jnp.float32),
        compiler_params=pltpu.CompilerParams(dimension_semantics=("parallel",)),
    )(x, mbias, *weights)


def _logits_kernel(x_ref, w_ref, b_ref, o_ref):
    o_ref[...] = jnp.dot(x_ref[...], w_ref[...],
                         preferred_element_type=jnp.float32) + b_ref[...]


def logits_head(x, w, b):
    """x: [M, HIDDEN] @ [HIDDEN, 2] + b -> [M, 2] (qa-head projection)."""
    M, K = x.shape
    _, N = w.shape
    return pl.pallas_call(
        _logits_kernel,
        grid_spec=pltpu.PrefetchScalarGridSpec(
            num_scalar_prefetch=0,
            grid=(1,),
            in_specs=[
                pl.BlockSpec((M, K), lambda i: (0, 0)),
                pl.BlockSpec((K, N), lambda i: (0, 0)),
                pl.BlockSpec((1, N), lambda i: (0, 0)),
            ],
            out_specs=pl.BlockSpec((M, N), lambda i: (0, 0)),
        ),
        out_shape=jax.ShapeDtypeStruct((M, N), jnp.float32),
        compiler_params=pltpu.CompilerParams(dimension_semantics=("arbitrary",)),
    )(x, w, b.reshape(1, N))


# ---------------------------- parameter creation ----------------------------
def _normal(key, shape, scale=0.02):
    return scale * jax.random.normal(key, shape, dtype=jnp.float32)


def init_params(seed=0):
    root = jax.random.PRNGKey(seed)
    counter = [0]

    def nk():  # deterministic across runs (no string hashing)
        counter[0] += 1
        return jax.random.fold_in(root, counter[0])

    params = {
        "word_emb": _normal(nk(), (VOCAB, HIDDEN)),
        "pos_emb": _normal(nk(), (MAX_POS, HIDDEN)),
        "type_emb": _normal(nk(), (TYPE_VOCAB, HIDDEN)),
        "emb_ln_g": jnp.ones((HIDDEN,), jnp.float32),
        "emb_ln_b": jnp.zeros((HIDDEN,), jnp.float32),
        "l0_w": _normal(nk(), (HIDDEN, 2)),
        "l0_b": jnp.zeros((2,), jnp.float32),
        "layers": [],
    }
    for _ in range(N_LAYERS):
        wq = _normal(nk(), (HIDDEN, HIDDEN))
        wk = _normal(nk(), (HIDDEN, HIDDEN))
        wv = _normal(nk(), (HIDDEN, HIDDEN))
        layer = {
            "wqkv": jnp.concatenate([wq, wk, wv], axis=1),   # fused QKV weight
            "bqkv": jnp.zeros((3 * HIDDEN,), jnp.float32),
            "wo": _normal(nk(), (HIDDEN, HIDDEN)),
            "bo": jnp.zeros((HIDDEN,), jnp.float32),
            "ln1_g": jnp.ones((HIDDEN,), jnp.float32),
            "ln1_b": jnp.zeros((HIDDEN,), jnp.float32),
            "w1": _normal(nk(), (HIDDEN, INTERMEDIATE)),
            "b1": jnp.zeros((INTERMEDIATE,), jnp.float32),
            "w2": _normal(nk(), (INTERMEDIATE, HIDDEN)),
            "b2": jnp.zeros((HIDDEN,), jnp.float32),
            "ln2_g": jnp.ones((HIDDEN,), jnp.float32),
            "ln2_b": jnp.zeros((HIDDEN,), jnp.float32),
        }
        params["layers"].append(layer)
    return params


# -------------------------------- forward pass -------------------------------
@jax.jit
def bert_base_uncased_forward(params, ids, mask, token_type_ids):
    """Returns (start_logits, end_logits), each [batch, seq]."""
    B, S = ids.shape

    # ---- embeddings (glue: XLA gathers) + LayerNorm kernel ----
    x = (params["word_emb"][ids]
         + params["pos_emb"][:S][None, :, :]
         + params["type_emb"][token_type_ids])
    x = layernorm(x.reshape(B * S, HIDDEN).astype(jnp.float32),
                  params["emb_ln_g"], params["emb_ln_b"]).reshape(B, S, HIDDEN)

    # extended attention mask kept per-batch only: [B, 1, S]
    mbias = ((1.0 - mask.astype(jnp.float32)) * -10000.0).reshape(B, 1, S)

    # ---- one fused Pallas kernel per encoder layer ----
    for layer in params["layers"]:
        x = encoder_layer(x, mbias, layer)

    # NOTE: BertModel's pooled_output (dense+tanh over [CLS]) is dead w.r.t.
    # the returned logits, so it is dropped (XLA would DCE it under jit anyway).

    # l0: hidden -> 2, split into start/end logits
    logits = logits_head(x.reshape(B * S, HIDDEN),
                         params["l0_w"], params["l0_b"]).reshape(B, S, 2)
    return logits[..., 0], logits[..., 1]


# ------------------------------------ main -----------------------------------
if __name__ == "__main__":
    B, S = 2, 8
    key = jax.random.PRNGKey(0)
    k_ids, k_mask, k_tt = jax.random.split(key, 3)

    ids = jax.random.randint(k_ids, (B, S), 0, VOCAB, dtype=jnp.int32)
    # valid-token mask: first 6 tokens of each sequence valid
    mask = (jnp.arange(S)[None, :] < 6).astype(jnp.int32) * jnp.ones((B, 1), jnp.int32)
    # token_type_ids: first half segment 0, second half segment 1
    token_type_ids = (jnp.arange(S)[None, :] >= S // 2).astype(jnp.int32) * jnp.ones((B, 1), jnp.int32)

    params = init_params(seed=0)

    start_logits, end_logits = bert_base_uncased_forward(params, ids, mask, token_type_ids)
    jax.block_until_ready((start_logits, end_logits))

    assert start_logits.shape == (B, S) and end_logits.shape == (B, S)
    assert start_logits.dtype == jnp.float32 and end_logits.dtype == jnp.float32
    assert bool(jnp.all(jnp.isfinite(start_logits))) and bool(jnp.all(jnp.isfinite(end_logits)))
    print("KERNEL_OK")
</pallas_src>

<mosaic_0001>
module attributes {stable_mosaic.version = 11 : i64} {
  func.func @_ln_kernel(%arg0: i32, %arg1: memref<16x32xf32, #tpu.memory_space<vmem>>, %arg2: memref<1x32xf32, #tpu.memory_space<vmem>>, %arg3: memref<1x32xf32, #tpu.memory_space<vmem>>, %arg4: memref<16x32xf32, #tpu.memory_space<vmem>>) attributes {dimension_semantics = [#tpu.dimension_semantics<arbitrary>], iteration_bounds = array<i64: 1>, scalar_prefetch = 0 : i64, scratch_operands = 0 : i64, tpu.core_type = #tpu.core_type<tc>, window_params = [{pipeline_mode = #tpu.pipeline_mode<synchronous>, transform_indices = @transform_0, window_bounds = array<i64: 16, 32>}, {pipeline_mode = #tpu.pipeline_mode<synchronous>, transform_indices = @transform_1, window_bounds = array<i64: 1, 32>}, {pipeline_mode = #tpu.pipeline_mode<synchronous>, transform_indices = @transform_2, window_bounds = array<i64: 1, 32>}, {pipeline_mode = #tpu.pipeline_mode<synchronous>, transform_indices = @transform_3, window_bounds = array<i64: 16, 32>}]} {
    %c0 = arith.constant 0 : index
    %c0_0 = arith.constant 0 : index
    %0 = vector.load %arg1[%c0, %c0_0] : memref<16x32xf32, #tpu.memory_space<vmem>>, vector<16x32xf32>
    %c0_1 = arith.constant 0 : index
    %c0_2 = arith.constant 0 : index
    %1 = vector.load %arg2[%c0_1, %c0_2] : memref<1x32xf32, #tpu.memory_space<vmem>>, vector<1x32xf32>
    %c0_3 = arith.constant 0 : index
    %c0_4 = arith.constant 0 : index
    %2 = vector.load %arg3[%c0_3, %c0_4] : memref<1x32xf32, #tpu.memory_space<vmem>>, vector<1x32xf32>
    %cst = arith.constant dense<0.000000e+00> : vector<16xf32>
    %3 = vector.multi_reduction <add>, %0, %cst [1] : vector<16x32xf32> to vector<16xf32>
    %4 = vector.shape_cast %3 : vector<16xf32> to vector<16x1xf32>
    %cst_5 = arith.constant 3.200000e+01 : f32
    %5 = vector.broadcast %cst_5 : f32 to vector<16x1xf32>
    %6 = arith.divf %4, %5 : vector<16x1xf32>
    %7 = vector.broadcast %6 : vector<16x1xf32> to vector<16x32xf32>
    %8 = arith.subf %0, %7 : vector<16x32xf32>
    %9 = vector.broadcast %6 : vector<16x1xf32> to vector<16x32xf32>
    %10 = arith.subf %0, %9 : vector<16x32xf32>
    %11 = arith.mulf %8, %10 : vector<16x32xf32>
    %cst_6 = arith.constant dense<0.000000e+00> : vector<16xf32>
    %12 = vector.multi_reduction <add>, %11, %cst_6 [1] : vector<16x32xf32> to vector<16xf32>
    %13 = vector.shape_cast %12 : vector<16xf32> to vector<16x1xf32>
    %cst_7 = arith.constant 3.200000e+01 : f32
    %14 = vector.broadcast %cst_7 : f32 to vector<16x1xf32>
    %15 = arith.divf %13, %14 : vector<16x1xf32>
    %16 = vector.broadcast %6 : vector<16x1xf32> to vector<16x32xf32>
    %17 = arith.subf %0, %16 : vector<16x32xf32>
    %cst_8 = arith.constant 9.99999996E-13 : f32
    %18 = vector.broadcast %cst_8 : f32 to vector<16x1xf32>
    %19 = arith.addf %15, %18 : vector<16x1xf32>
    %20 = math.rsqrt %19 : vector<16x1xf32>
    %21 = vector.broadcast %20 : vector<16x1xf32> to vector<16x32xf32>
    %22 = arith.mulf %17, %21 : vector<16x32xf32>
    %23 = vector.broadcast %1 : vector<1x32xf32> to vector<16x32xf32>
    %24 = arith.mulf %22, %23 : vector<16x32xf32>
    %25 = vector.broadcast %2 : vector<1x32xf32> to vector<16x32xf32>
    %26 = arith.addf %24, %25 : vector<16x32xf32>
    %c0_9 = arith.constant 0 : index
    %c0_10 = arith.constant 0 : index
    %27 = vector.load %arg4[%c0_9, %c0_10] : memref<16x32xf32, #tpu.memory_space<vmem>>, vector<16x32xf32>
    tpu.vector_store %arg4[%c0_9, %c0_10], %26 {strides = array<i32>} : memref<16x32xf32, #tpu.memory_space<vmem>>, vector<16x32xf32>,
    return
  }
  func.func @transform_0(%arg0: i32) -> (i32, i32) {
    %c0_i32 = arith.constant 0 : i32
    %c0_i32_0 = arith.constant 0 : i32
    %c0_i32_1 = arith.constant 0 : i32
    return %c0_i32, %c0_i32_0 : i32, i32
  }
  func.func @transform_1(%arg0: i32) -> (i32, i32) {
    %c0_i32 = arith.constant 0 : i32
    %c0_i32_0 = arith.constant 0 : i32
    %c0_i32_1 = arith.constant 0 : i32
    return %c0_i32, %c0_i32_0 : i32, i32
  }
  func.func @transform_2(%arg0: i32) -> (i32, i32) {
    %c0_i32 = arith.constant 0 : i32
    %c0_i32_0 = arith.constant 0 : i32
    %c0_i32_1 = arith.constant 0 : i32
    return %c0_i32, %c0_i32_0 : i32, i32
  }
  func.func @transform_3(%arg0: i32) -> (i32, i32) {
    %c0_i32 = arith.constant 0 : i32
    %c0_i32_0 = arith.constant 0 : i32
    %c0_i32_1 = arith.constant 0 : i32
    return %c0_i32, %c0_i32_0 : i32, i32
  }
}

module attributes {stable_mosaic.version = 11 : i64} {
  func.func @_encoder_layer_kernel(%arg0: i32, %arg1: memref<1x8x32xf32, #tpu.memory_space<vmem>>, %arg2: memref<1x1x8xf32, #tpu.memory_space<vmem>>, %arg3: memref<32x96xf32, #tpu.memory_space<vmem>>, %arg4: memref<1x96xf32, #tpu.memory_space<vmem>>, %arg5: memref<32x32xf32, #tpu.memory_space<vmem>>, %arg6: memref<1x32xf32, #tpu.memory_space<vmem>>, %arg7: memref<1x32xf32, #tpu.memory_space<vmem>>, %arg8: memref<1x32xf32, #tpu.memory_space<vmem>>, %arg9: memref<32x64xf32, #tpu.memory_space<vmem>>, %arg10: memref<1x64xf32, #tpu.memory_space<vmem>>, %arg11: memref<64x32xf32, #tpu.memory_space<vmem>>, %arg12: memref<1x32xf32, #tpu.memory_space<vmem>>, %arg13: memref<1x32xf32, #tpu.memory_space<vmem>>, %arg14: memref<1x32xf32, #tpu.memory_space<vmem>>, %arg15: memref<1x8x32xf32, #tpu.memory_space<vmem>>) attributes {dimension_semantics = [#tpu.dimension_semantics<parallel>], iteration_bounds = array<i64: 2>, scalar_prefetch = 0 : i64, scratch_operands = 0 : i64, tpu.core_type = #tpu.core_type<tc>, window_params = [{transform_indices = @transform_0, window_bounds = array<i64: 1, 8, 32>}, {transform_indices = @transform_1, window_bounds = array<i64: 1, 1, 8>}, {pipeline_mode = #tpu.pipeline_mode<synchronous>, transform_indices = @transform_2, window_bounds = array<i64: 32, 96>}, {pipeline_mode = #tpu.pipeline_mode<synchronous>, transform_indices = @transform_3, window_bounds = array<i64: 1, 96>}, {pipeline_mode = #tpu.pipeline_mode<synchronous>, transform_indices = @transform_4, window_bounds = array<i64: 32, 32>}, {pipeline_mode = #tpu.pipeline_mode<synchronous>, transform_indices = @transform_5, window_bounds = array<i64: 1, 32>}, {pipeline_mode = #tpu.pipeline_mode<synchronous>, transform_indices = @transform_6, window_bounds = array<i64: 1, 32>}, {pipeline_mode = #tpu.pipeline_mode<synchronous>, transform_indices = @transform_7, window_bounds = array<i64: 1, 32>}, {pipeline_mode = #tpu.pipeline_mode<synchronous>, transform_indices = @transform_8, window_bounds = array<i64: 32, 64>}, {pipeline_mode = #tpu.pipeline_mode<synchronous>, transform_indices = @transform_9, window_bounds = array<i64: 1, 64>}, {pipeline_mode = #tpu.pipeline_mode<synchronous>, transform_indices = @transform_10, window_bounds = array<i64: 64, 32>}, {pipeline_mode = #tpu.pipeline_mode<synchronous>, transform_indices = @transform_11, window_bounds = array<i64: 1, 32>}, {pipeline_mode = #tpu.pipeline_mode<synchronous>, transform_indices = @transform_12, window_bounds = array<i64: 1, 32>}, {pipeline_mode = #tpu.pipeline_mode<synchronous>, transform_indices = @transform_13, window_bounds = array<i64: 1, 32>}, {transform_indices = @transform_14, window_bounds = array<i64: 1, 8, 32>}]} {
    %c0 = arith.constant 0 : index
    %c0_0 = arith.constant 0 : index
    %c0_1 = arith.constant 0 : index
    %0 = vector.load %arg1[%c0, %c0_0, %c0_1] : memref<1x8x32xf32, #tpu.memory_space<vmem>>, vector<1x8x32xf32>
    %1 = vector.shape_cast %0 : vector<1x8x32xf32> to vector<8x32xf32>
    %c0_2 = arith.constant 0 : index
    %c0_3 = arith.constant 0 : index
    %c0_4 = arith.constant 0 : index
    %2 = vector.load %arg2[%c0_2, %c0_3, %c0_4] : memref<1x1x8xf32, #tpu.memory_space<vmem>>, vector<1x1x8xf32>
    %3 = vector.shape_cast %2 : vector<1x1x8xf32> to vector<1x8xf32>
    %c0_5 = arith.constant 0 : index
    %c0_6 = arith.constant 0 : index
    %4 = vector.load %arg3[%c0_5, %c0_6] : memref<32x96xf32, #tpu.memory_space<vmem>>, vector<32x96xf32>
    %cst = arith.constant dense<0.000000e+00> : vector<8x96xf32>
    %5 = tpu.matmul %1, %4, %cst {dimension_numbers = #tpu.dot_dimension_numbers<[1], [0], [0], [1], [0, 0, 1, 1], [], []>} : vector<8x32xf32>, vector<32x96xf32>, vector<8x96xf32> -> vector<8x96xf32>
    %c0_7 = arith.constant 0 : index
    %c0_8 = arith.constant 0 : index
    %6 = vector.load %arg4[%c0_7, %c0_8] : memref<1x96xf32, #tpu.memory_space<vmem>>, vector<1x96xf32>
    %7 = vector.broadcast %6 : vector<1x96xf32> to vector<8x96xf32>
    %8 = arith.addf %5, %7 : vector<8x96xf32>
    %c0_9 = arith.constant 0 : index
    %c0_10 = arith.constant 0 : index
    %9 = vector.load %arg6[%c0_9, %c0_10] : memref<1x32xf32, #tpu.memory_space<vmem>>, vector<1x32xf32>
    %10 = vector.broadcast %9 : vector<1x32xf32> to vector<8x32xf32>
    %11 = arith.addf %1, %10 : vector<8x32xf32>
    %12 = vector.extract_strided_slice %8 {offsets = [0, 0], sizes = [8, 8], strides = [1, 1]} : vector<8x96xf32> to vector<8x8xf32>
    %cst_11 = arith.constant 0.353553385 : f32
    %13 = vector.broadcast %cst_11 : f32 to vector<8x8xf32>
    %14 = arith.mulf %12, %13 : vector<8x8xf32>
    %15 = vector.extract_strided_slice %8 {offsets = [0, 32], sizes = [8, 8], strides = [1, 1]} : vector<8x96xf32> to vector<8x8xf32>
    %16 = vector.extract_strided_slice %8 {offsets = [0, 64], sizes = [8, 8], strides = [1, 1]} : vector<8x96xf32> to vector<8x8xf32>
    %cst_12 = arith.constant dense<0.000000e+00> : vector<8x8xf32>
    %17 = tpu.matmul %14, %15, %cst_12 {dimension_numbers = #tpu.dot_dimension_numbers<[1], [1], [0], [0], [0, 0, 1, 0], [], []>} : vector<8x8xf32>, vector<8x8xf32>, vector<8x8xf32> -> vector<8x8xf32>
    %18 = vector.broadcast %3 : vector<1x8xf32> to vector<8x8xf32>
    %19 = arith.addf %17, %18 : vector<8x8xf32>
    %cst_13 = arith.constant dense<0xFF800000> : vector<8xf32>
    %20 = vector.multi_reduction <maximumf>, %19, %cst_13 [1] : vector<8x8xf32> to vector<8xf32>
    %21 = vector.shape_cast %20 : vector<8xf32> to vector<8x1xf32>
    %22 = vector.broadcast %21 : vector<8x1xf32> to vector<8x8xf32>
    %23 = arith.subf %19, %22 : vector<8x8xf32>
    %24 = math.exp %23 : vector<8x8xf32>
    %cst_14 = arith.constant dense<0.000000e+00> : vector<8xf32>
    %25 = vector.multi_reduction <add>, %24, %cst_14 [1] : vector<8x8xf32> to vector<8xf32>
    %26 = vector.shape_cast %25 : vector<8xf32> to vector<8x1xf32>
    %cst_15 = arith.constant dense<0.000000e+00> : vector<8x8xf32>
    %27 = tpu.matmul %24, %16, %cst_15 {dimension_numbers = #tpu.dot_dimension_numbers<[1], [0], [0], [1], [0, 0, 1, 1], [], []>} : vector<8x8xf32>, vector<8x8xf32>, vector<8x8xf32> -> vector<8x8xf32>
    %28 = tpu.reciprocal %26 {approx = true} : vector<8x1xf32> -> vector<8x1xf32>
    %29 = vector.broadcast %28 : vector<8x1xf32> to vector<8x8xf32>
    %30 = arith.mulf %27, %29 : vector<8x8xf32>
    %c0_16 = arith.constant 0 : index
    %c0_17 = arith.constant 0 : index
    %31 = vector.load %arg5[%c0_16, %c0_17] : memref<32x32xf32, #tpu.memory_space<vmem>>, vector<8x32xf32>
    %cst_18 = arith.constant dense<0.000000e+00> : vector<8x32xf32>
    %32 = tpu.matmul %30, %31, %cst_18 {dimension_numbers = #tpu.dot_dimension_numbers<[1], [0], [0], [1], [0, 0, 1, 1], [], []>} : vector<8x8xf32>, vector<8x32xf32>, vector<8x32xf32> -> vector<8x32xf32>
    %33 = arith.addf %11, %32 : vector<8x32xf32>
    %34 = vector.extract_strided_slice %8 {offsets = [0, 8], sizes = [8, 8], strides = [1, 1]} : vector<8x96xf32> to vector<8x8xf32>
    %cst_19 = arith.constant 0.353553385 : f32
    %35 = vector.broadcast %cst_19 : f32 to vector<8x8xf32>
    %36 = arith.mulf %34, %35 : vector<8x8xf32>
    %37 = vector.extract_strided_slice %8 {offsets = [0, 40], sizes = [8, 8], strides = [1, 1]} : vector<8x96xf32> to vector<8x8xf32>
    %38 = vector.extract_strided_slice %8 {offsets = [0, 72], sizes = [8, 8], strides = [1, 1]} : vector<8x96xf32> to vector<8x8xf32>
    %cst_20 = arith.constant dense<0.000000e+00> : vector<8x8xf32>
    %39 = tpu.matmul %36, %37, %cst_20 {dimension_numbers = #tpu.dot_dimension_numbers<[1], [1], [0], [0], [0, 0, 1, 0], [], []>} : vector<8x8xf32>, vector<8x8xf32>, vector<8x8xf32> -> vector<8x8xf32>
    %40 = vector.broadcast %3 : vector<1x8xf32> to vector<8x8xf32>
    %41 = arith.addf %39, %40 : vector<8x8xf32>
    %cst_21 = arith.constant dense<0xFF800000> : vector<8xf32>
    %42 = vector.multi_reduction <maximumf>, %41, %cst_21 [1] : vector<8x8xf32> to vector<8xf32>
    %43 = vector.shape_cast %42 : vector<8xf32> to vector<8x1xf32>
    %44 = vector.broadcast %43 : vector<8x1xf32> to vector<8x8xf32>
    %45 = arith.subf %41, %44 : vector<8x8xf32>
    %46 = math.exp %45 : vector<8x8xf32>
    %cst_22 = arith.constant dense<0.000000e+00> : vector<8xf32>
    %47 = vector.multi_reduction <add>, %46, %cst_22 [1] : vector<8x8xf32> to vector<8xf32>
    %48 = vector.shape_cast %47 : vector<8xf32> to vector<8x1xf32>
    %cst_23 = arith.constant dense<0.000000e+00> : vector<8x8xf32>
    %49 = tpu.matmul %46, %38, %cst_23 {dimension_numbers = #tpu.dot_dimension_numbers<[1], [0], [0], [1], [0, 0, 1, 1], [], []>} : vector<8x8xf32>, vector<8x8xf32>, vector<8x8xf32> -> vector<8x8xf32>
    %50 = tpu.reciprocal %48 {approx = true} : vector<8x1xf32> -> vector<8x1xf32>
    %51 = vector.broadcast %50 : vector<8x1xf32> to vector<8x8xf32>
    %52 = arith.mulf %49, %51 : vector<8x8xf32>
    %c8 = arith.constant 8 : index
    %c0_24 = arith.constant 0 : index
    %53 = vector.load %arg5[%c8, %c0_24] : memref<32x32xf32, #tpu.memory_space<vmem>>, vector<8x32xf32>
    %cst_25 = arith.constant dense<0.000000e+00> : vector<8x32xf32>
    %54 = tpu.matmul %52, %53, %cst_25 {dimension_numbers = #tpu.dot_dimension_numbers<[1], [0], [0], [1], [0, 0, 1, 1], [], []>} : vector<8x8xf32>, vector<8x32xf32>, vector<8x32xf32> -> vector<8x32xf32>
    %55 = arith.addf %33, %54 : vector<8x32xf32>
    %56 = vector.extract_strided_slice %8 {offsets = [0, 16], sizes = [8, 8], strides = [1, 1]} : vector<8x96xf32> to vector<8x8xf32>
    %cst_26 = arith.constant 0.353553385 : f32
    %57 = vector.broadcast %cst_26 : f32 to vector<8x8xf32>
    %58 = arith.mulf %56, %57 : vector<8x8xf32>
    %59 = vector.extract_strided_slice %8 {offsets = [0, 48], sizes = [8, 8], strides = [1, 1]} : vector<8x96xf32> to vector<8x8xf32>
    %60 = vector.extract_strided_slice %8 {offsets = [0, 80], sizes = [8, 8], strides = [1, 1]} : vector<8x96xf32> to vector<8x8xf32>
    %cst_27 = arith.constant dense<0.000000e+00> : vector<8x8xf32>
    %61 = tpu.matmul %58, %59, %cst_27 {dimension_numbers = #tpu.dot_dimension_numbers<[1], [1], [0], [0], [0, 0, 1, 0], [], []>} : vector<8x8xf32>, vector<8x8xf32>, vector<8x8xf32> -> vector<8x8xf32>
    %62 = vector.broadcast %3 : vector<1x8xf32> to vector<8x8xf32>
    %63 = arith.addf %61, %62 : vector<8x8xf32>
    %cst_28 = arith.constant dense<0xFF800000> : vector<8xf32>
    %64 = vector.multi_reduction <maximumf>, %63, %cst_28 [1] : vector<8x8xf32> to vector<8xf32>
    %65 = vector.shape_cast %64 : vector<8xf32> to vector<8x1xf32>
    %66 = vector.broadcast %65 : vector<8x1xf32> to vector<8x8xf32>
    %67 = arith.subf %63, %66 : vector<8x8xf32>
    %68 = math.exp %67 : vector<8x8xf32>
    %cst_29 = arith.constant dense<0.000000e+00> : vector<8xf32>
    %69 = vector.multi_reduction <add>, %68, %cst_29 [1] : vector<8x8xf32> to vector<8xf32>
    %70 = vector.shape_cast %69 : vector<8xf32> to vector<8x1xf32>
    %cst_30 = arith.constant dense<0.000000e+00> : vector<8x8xf32>
    %71 = tpu.matmul %68, %60, %cst_30 {dimension_numbers = #tpu.dot_dimension_numbers<[1], [0], [0], [1], [0, 0, 1, 1], [], []>} : vector<8x8xf32>, vector<8x8xf32>, vector<8x8xf32> -> vector<8x8xf32>
    %72 = tpu.reciprocal %70 {approx = true} : vector<8x1xf32> -> vector<8x1xf32>
    %73 = vector.broadcast %72 : vector<8x1xf32> to vector<8x8xf32>
    %74 = arith.mulf %71, %73 : vector<8x8xf32>
    %c16 = arith.constant 16 : index
    %c0_31 = arith.constant 0 : index
    %75 = vector.load %arg5[%c16, %c0_31] : memref<32x32xf32, #tpu.memory_space<vmem>>, vector<8x32xf32>
    %cst_32 = arith.constant dense<0.000000e+00> : vector<8x32xf32>
    %76 = tpu.matmul %74, %75, %cst_32 {dimension_numbers = #tpu.dot_dimension_numbers<[1], [0], [0], [1], [0, 0, 1, 1], [], []>} : vector<8x8xf32>, vector<8x32xf32>, vector<8x32xf32> -> vector<8x32xf32>
    %77 = arith.addf %55, %76 : vector<8x32xf32>
    %78 = vector.extract_strided_slice %8 {offsets = [0, 24], sizes = [8, 8], strides = [1, 1]} : vector<8x96xf32> to vector<8x8xf32>
    %cst_33 = arith.constant 0.353553385 : f32
    %79 = vector.broadcast %cst_33 : f32 to vector<8x8xf32>
    %80 = arith.mulf %78, %79 : vector<8x8xf32>
    %81 = vector.extract_strided_slice %8 {offsets = [0, 56], sizes = [8, 8], strides = [1, 1]} : vector<8x96xf32> to vector<8x8xf32>
    %82 = vector.extract_strided_slice %8 {offsets = [0, 88], sizes = [8, 8], strides = [1, 1]} : vector<8x96xf32> to vector<8x8xf32>
    %cst_34 = arith.constant dense<0.000000e+00> : vector<8x8xf32>
    %83 = tpu.matmul %80, %81, %cst_34 {dimension_numbers = #tpu.dot_dimension_numbers<[1], [1], [0], [0], [0, 0, 1, 0], [], []>} : vector<8x8xf32>, vector<8x8xf32>, vector<8x8xf32> -> vector<8x8xf32>
    %84 = vector.broadcast %3 : vector<1x8xf32> to vector<8x8xf32>
    %85 = arith.addf %83, %84 : vector<8x8xf32>
    %cst_35 = arith.constant dense<0xFF800000> : vector<8xf32>
    %86 = vector.multi_reduction <maximumf>, %85, %cst_35 [1] : vector<8x8xf32> to vector<8xf32>
    %87 = vector.shape_cast %86 : vector<8xf32> to vector<8x1xf32>
    %88 = vector.broadcast %87 : vector<8x1xf32> to vector<8x8xf32>
    %89 = arith.subf %85, %88 : vector<8x8xf32>
    %90 = math.exp %89 : vector<8x8xf32>
    %cst_36 = arith.constant dense<0.000000e+00> : vector<8xf32>
    %91 = vector.multi_reduction <add>, %90, %cst_36 [1] : vector<8x8xf32> to vector<8xf32>
    %92 = vector.shape_cast %91 : vector<8xf32> to vector<8x1xf32>
    %cst_37 = arith.constant dense<0.000000e+00> : vector<8x8xf32>
    %93 = tpu.matmul %90, %82, %cst_37 {dimension_numbers = #tpu.dot_dimension_numbers<[1], [0], [0], [1], [0, 0, 1, 1], [], []>} : vector<8x8xf32>, vector<8x8xf32>, vector<8x8xf32> -> vector<8x8xf32>
    %94 = tpu.reciprocal %92 {approx = true} : vector<8x1xf32> -> vector<8x1xf32>
    %95 = vector.broadcast %94 : vector<8x1xf32> to vector<8x8xf32>
    %96 = arith.mulf %93, %95 : vector<8x8xf32>
    %c24 = arith.constant 24 : index
    %c0_38 = arith.constant 0 : index
    %97 = vector.load %arg5[%c24, %c0_38] : memref<32x32xf32, #tpu.memory_space<vmem>>, vector<8x32xf32>
    %cst_39 = arith.constant dense<0.000000e+00> : vector<8x32xf32>
    %98 = tpu.matmul %96, %97, %cst_39 {dimension_numbers = #tpu.dot_dimension_numbers<[1], [0], [0], [1], [0, 0, 1, 1], [], []>} : vector<8x8xf32>, vector<8x32xf32>, vector<8x32xf32> -> vector<8x32xf32>
    %99 = arith.addf %77, %98 : vector<8x32xf32>
    %c0_40 = arith.constant 0 : index
    %c0_41 = arith.constant 0 : index
    %100 = vector.load %arg7[%c0_40, %c0_41] : memref<1x32xf32, #tpu.memory_space<vmem>>, vector<1x32xf32>
    %c0_42 = arith.constant 0 : index
    %c0_43 = arith.constant 0 : index
    %101 = vector.load %arg8[%c0_42, %c0_43] : memref<1x32xf32, #tpu.memory_space<vmem>>, vector<1x32xf32>
    %cst_44 = arith.constant dense<0.000000e+00> : vector<8xf32>
    %102 = vector.multi_reduction <add>, %99, %cst_44 [1] : vector<8x32xf32> to vector<8xf32>
    %103 = vector.shape_cast %102 : vector<8xf32> to vector<8x1xf32>
    %cst_45 = arith.constant 3.200000e+01 : f32
    %104 = vector.broadcast %cst_45 : f32 to vector<8x1xf32>
    %105 = arith.divf %103, %104 : vector<8x1xf32>
    %106 = vector.broadcast %105 : vector<8x1xf32> to vector<8x32xf32>
    %107 = arith.subf %99, %106 : vector<8x32xf32>
    %108 = vector.broadcast %105 : vector<8x1xf32> to vector<8x32xf32>
    %109 = arith.subf %99, %108 : vector<8x32xf32>
    %110 = arith.mulf %107, %109 : vector<8x32xf32>
    %cst_46 = arith.constant dense<0.000000e+00> : vector<8xf32>
    %111 = vector.multi_reduction <add>, %110, %cst_46 [1] : vector<8x32xf32> to vector<8xf32>
    %112 = vector.shape_cast %111 : vector<8xf32> to vector<8x1xf32>
    %cst_47 = arith.constant 3.200000e+01 : f32
    %113 = vector.broadcast %cst_47 : f32 to vector<8x1xf32>
    %114 = arith.divf %112, %113 : vector<8x1xf32>
    %115 = vector.broadcast %105 : vector<8x1xf32> to vector<8x32xf32>
    %116 = arith.subf %99, %115 : vector<8x32xf32>
    %cst_48 = arith.constant 9.99999996E-13 : f32
    %117 = vector.broadcast %cst_48 : f32 to vector<8x1xf32>
    %118 = arith.addf %114, %117 : vector<8x1xf32>
    %119 = math.rsqrt %118 : vector<8x1xf32>
    %120 = vector.broadcast %119 : vector<8x1xf32> to vector<8x32xf32>
    %121 = arith.mulf %116, %120 : vector<8x32xf32>
    %122 = vector.broadcast %100 : vector<1x32xf32> to vector<8x32xf32>
    %123 = arith.mulf %121, %122 : vector<8x32xf32>
    %124 = vector.broadcast %101 : vector<1x32xf32> to vector<8x32xf32>
    %125 = arith.addf %123, %124 : vector<8x32xf32>
    %c0_49 = arith.constant 0 : index
    %c0_50 = arith.constant 0 : index
    %126 = vector.load %arg9[%c0_49, %c0_50] : memref<32x64xf32, #tpu.memory_space<vmem>>, vector<32x64xf32>
    %cst_51 = arith.constant dense<0.000000e+00> : vector<8x64xf32>
    %127 = tpu.matmul %125, %126, %cst_51 {dimension_numbers = #tpu.dot_dimension_numbers<[1], [0], [0], [1], [0, 0, 1, 1], [], []>} : vector<8x32xf32>, vector<32x64xf32>, vector<8x64xf32> -> vector<8x64xf32>
    %c0_52 = arith.constant 0 : index
    %c0_53 = arith.constant 0 : index
    %128 = vector.load %arg10[%c0_52, %c0_53] : memref<1x64xf32, #tpu.memory_space<vmem>>, vector<1x64xf32>
    %129 = vector.broadcast %128 : vector<1x64xf32> to vector<8x64xf32>
    %130 = arith.addf %127, %129 : vector<8x64xf32>
    %cst_54 = arith.constant 5.000000e-01 : f32
    %131 = vector.broadcast %cst_54 : f32 to vector<8x64xf32>
    %132 = arith.mulf %131, %130 : vector<8x64xf32>
    %cst_55 = arith.constant 4.471500e-02 : f32
    %133 = vector.broadcast %cst_55 : f32 to vector<8x64xf32>
    %134 = arith.mulf %133, %130 : vector<8x64xf32>
    %135 = arith.mulf %134, %130 : vector<8x64xf32>
    %136 = arith.mulf %135, %130 : vector<8x64xf32>
    %137 = arith.addf %130, %136 : vector<8x64xf32>
    %cst_56 = arith.constant 0.797884583 : f32
    %138 = vector.broadcast %cst_56 : f32 to vector<8x64xf32>
    %139 = arith.mulf %138, %137 : vector<8x64xf32>
    %140 = math.tanh %139 : vector<8x64xf32>
    %cst_57 = arith.constant 1.000000e+00 : f32
    %141 = vector.broadcast %cst_57 : f32 to vector<8x64xf32>
    %142 = arith.addf %141, %140 : vector<8x64xf32>
    %143 = arith.mulf %132, %142 : vector<8x64xf32>
    %c0_58 = arith.constant 0 : index
    %c0_59 = arith.constant 0 : index
    %144 = vector.load %arg11[%c0_58, %c0_59] : memref<64x32xf32, #tpu.memory_space<vmem>>, vector<64x32xf32>
    %cst_60 = arith.constant dense<0.000000e+00> : vector<8x32xf32>
    %145 = tpu.matmul %143, %144, %cst_60 {dimension_numbers = #tpu.dot_dimension_numbers<[1], [0], [0], [1], [0, 0, 1, 1], [], []>} : vector<8x64xf32>, vector<64x32xf32>, vector<8x32xf32> -> vector<8x32xf32>
    %c0_61 = arith.constant 0 : index
    %c0_62 = arith.constant 0 : index
    %146 = vector.load %arg12[%c0_61, %c0_62] : memref<1x32xf32, #tpu.memory_space<vmem>>, vector<1x32xf32>
    %147 = vector.broadcast %146 : vector<1x32xf32> to vector<8x32xf32>
    %148 = arith.addf %145, %147 : vector<8x32xf32>
    %149 = arith.addf %148, %125 : vector<8x32xf32>
    %c0_63 = arith.constant 0 : index
    %c0_64 = arith.constant 0 : index
    %150 = vector.load %arg13[%c0_63, %c0_64] : memref<1x32xf32, #tpu.memory_space<vmem>>, vector<1x32xf32>
    %c0_65 = arith.constant 0 : index
    %c0_66 = arith.constant 0 : index
    %151 = vector.load %arg14[%c0_65, %c0_66] : memref<1x32xf32, #tpu.memory_space<vmem>>, vector<1x32xf32>
    %cst_67 = arith.constant dense<0.000000e+00> : vector<8xf32>
    %152 = vector.multi_reduction <add>, %149, %cst_67 [1] : vector<8x32xf32> to vector<8xf32>
    %153 = vector.shape_cast %152 : vector<8xf32> to vector<8x1xf32>
    %cst_68 = arith.constant 3.200000e+01 : f32
    %154 = vector.broadcast %cst_68 : f32 to vector<8x1xf32>
    %155 = arith.divf %153, %154 : vector<8x1xf32>
    %156 = vector.broadcast %155 : vector<8x1xf32> to vector<8x32xf32>
    %157 = arith.subf %149, %156 : vector<8x32xf32>
    %158 = vector.broadcast %155 : vector<8x1xf32> to vector<8x32xf32>
    %159 = arith.subf %149, %158 : vector<8x32xf32>
    %160 = arith.mulf %157, %159 : vector<8x32xf32>
    %cst_69 = arith.constant dense<0.000000e+00> : vector<8xf32>
    %161 = vector.multi_reduction <add>, %160, %cst_69 [1] : vector<8x32xf32> to vector<8xf32>
    %162 = vector.shape_cast %161 : vector<8xf32> to vector<8x1xf32>
    %cst_70 = arith.constant 3.200000e+01 : f32
    %163 = vector.broadcast %cst_70 : f32 to vector<8x1xf32>
    %164 = arith.divf %162, %163 : vector<8x1xf32>
    %165 = vector.broadcast %155 : vector<8x1xf32> to vector<8x32xf32>
    %166 = arith.subf %149, %165 : vector<8x32xf32>
    %cst_71 = arith.constant 9.99999996E-13 : f32
    %167 = vector.broadcast %cst_71 : f32 to vector<8x1xf32>
    %168 = arith.addf %164, %167 : vector<8x1xf32>
    %169 = math.rsqrt %168 : vector<8x1xf32>
    %170 = vector.broadcast %169 : vector<8x1xf32> to vector<8x32xf32>
    %171 = arith.mulf %166, %170 : vector<8x32xf32>
    %172 = vector.broadcast %150 : vector<1x32xf32> to vector<8x32xf32>
    %173 = arith.mulf %171, %172 : vector<8x32xf32>
    %174 = vector.broadcast %151 : vector<1x32xf32> to vector<8x32xf32>
    %175 = arith.addf %173, %174 : vector<8x32xf32>
    %c0_72 = arith.constant 0 : index
    %c0_73 = arith.constant 0 : index
    %c0_74 = arith.constant 0 : index
    %176 = vector.load %arg15[%c0_72, %c0_73, %c0_74] : memref<1x8x32xf32, #tpu.memory_space<vmem>>, vector<1x8x32xf32>
    %177 = vector.shape_cast %176 : vector<1x8x32xf32> to vector<8x32xf32>
    %178 = vector.shape_cast %175 : vector<8x32xf32> to vector<1x8x32xf32>
    tpu.vector_store %arg15[%c0_72, %c0_73, %c0_74], %178 {strides = array<i32>} : memref<1x8x32xf32, #tpu.memory_space<vmem>>, vector<1x8x32xf32>,
    return
  }
  func.func @transform_0(%arg0: i32) -> (i32, i32, i32) {
    %c0_i32 = arith.constant 0 : i32
    %c0_i32_0 = arith.constant 0 : i32
    %c0_i32_1 = arith.constant 0 : i32
    return %arg0, %c0_i32, %c0_i32_0 : i32, i32, i32
  }
  func.func @transform_1(%arg0: i32) -> (i32, i32, i32) {
    %c0_i32 = arith.constant 0 : i32
    %c0_i32_0 = arith.constant 0 : i32
    %c0_i32_1 = arith.constant 0 : i32
    return %arg0, %c0_i32, %c0_i32_0 : i32, i32, i32
  }
  func.func @transform_2(%arg0: i32) -> (i32, i32) {
    %c0_i32 = arith.constant 0 : i32
    %c0_i32_0 = arith.constant 0 : i32
    %c0_i32_1 = arith.constant 0 : i32
    return %c0_i32, %c0_i32_0 : i32, i32
  }
  func.func @transform_3(%arg0: i32) -> (i32, i32) {
    %c0_i32 = arith.constant 0 : i32
    %c0_i32_0 = arith.constant 0 : i32
    %c0_i32_1 = arith.constant 0 : i32
    return %c0_i32, %c0_i32_0 : i32, i32
  }
  func.func @transform_4(%arg0: i32) -> (i32, i32) {
    %c0_i32 = arith.constant 0 : i32
    %c0_i32_0 = arith.constant 0 : i32
    %c0_i32_1 = arith.constant 0 : i32
    return %c0_i32, %c0_i32_0 : i32, i32
  }
  func.func @transform_5(%arg0: i32) -> (i32, i32) {
    %c0_i32 = arith.constant 0 : i32
    %c0_i32_0 = arith.constant 0 : i32
    %c0_i32_1 = arith.constant 0 : i32
    return %c0_i32, %c0_i32_0 : i32, i32
  }
  func.func @transform_6(%arg0: i32) -> (i32, i32) {
    %c0_i32 = arith.constant 0 : i32
    %c0_i32_0 = arith.constant 0 : i32
    %c0_i32_1 = arith.constant 0 : i32
    return %c0_i32, %c0_i32_0 : i32, i32
  }
  func.func @transform_7(%arg0: i32) -> (i32, i32) {
    %c0_i32 = arith.constant 0 : i32
    %c0_i32_0 = arith.constant 0 : i32
    %c0_i32_1 = arith.constant 0 : i32
    return %c0_i32, %c0_i32_0 : i32, i32
  }
  func.func @transform_8(%arg0: i32) -> (i32, i32) {
    %c0_i32 = arith.constant 0 : i32
    %c0_i32_0 = arith.constant 0 : i32
    %c0_i32_1 = arith.constant 0 : i32
    return %c0_i32, %c0_i32_0 : i32, i32
  }
  func.func @transform_9(%arg0: i32) -> (i32, i32) {
    %c0_i32 = arith.constant 0 : i32
    %c0_i32_0 = arith.constant 0 : i32
    %c0_i32_1 = arith.constant 0 : i32
    return %c0_i32, %c0_i32_0 : i32, i32
  }
  func.func @transform_10(%arg0: i32) -> (i32, i32) {
    %c0_i32 = arith.constant 0 : i32
    %c0_i32_0 = arith.constant 0 : i32
    %c0_i32_1 = arith.constant 0 : i32
    return %c0_i32, %c0_i32_0 : i32, i32
  }
  func.func @transform_11(%arg0: i32) -> (i32, i32) {
    %c0_i32 = arith.constant 0 : i32
    %c0_i32_0 = arith.constant 0 : i32
    %c0_i32_1 = arith.constant 0 : i32
    return %c0_i32, %c0_i32_0 : i32, i32
  }
  func.func @transform_12(%arg0: i32) -> (i32, i32) {
    %c0_i32 = arith.constant 0 : i32
    %c0_i32_0 = arith.constant 0 : i32
    %c0_i32_1 = arith.constant 0 : i32
    return %c0_i32, %c0_i32_0 : i32, i32
  }
  func.func @transform_13(%arg0: i32) -> (i32, i32) {
    %c0_i32 = arith.constant 0 : i32
    %c0_i32_0 = arith.constant 0 : i32
    %c0_i32_1 = arith.constant 0 : i32
    return %c0_i32, %c0_i32_0 : i32, i32
  }
  func.func @transform_14(%arg0: i32) -> (i32, i32, i32) {
    %c0_i32 = arith.constant 0 : i32
    %c0_i32_0 = arith.constant 0 : i32
    %c0_i32_1 = arith.constant 0 : i32
    return %arg0, %c0_i32, %c0_i32_0 : i32, i32, i32
  }
}

module attributes {stable_mosaic.version = 11 : i64} {
  func.func @_logits_kernel(%arg0: i32, %arg1: memref<16x32xf32, #tpu.memory_space<vmem>>, %arg2: memref<32x2xf32, #tpu.memory_space<vmem>>, %arg3: memref<1x2xf32, #tpu.memory_space<vmem>>, %arg4: memref<16x2xf32, #tpu.memory_space<vmem>>) attributes {dimension_semantics = [#tpu.dimension_semantics<arbitrary>], iteration_bounds = array<i64: 1>, scalar_prefetch = 0 : i64, scratch_operands = 0 : i64, tpu.core_type = #tpu.core_type<tc>, window_params = [{pipeline_mode = #tpu.pipeline_mode<synchronous>, transform_indices = @transform_0, window_bounds = array<i64: 16, 32>}, {pipeline_mode = #tpu.pipeline_mode<synchronous>, transform_indices = @transform_1, window_bounds = array<i64: 32, 2>}, {pipeline_mode = #tpu.pipeline_mode<synchronous>, transform_indices = @transform_2, window_bounds = array<i64: 1, 2>}, {pipeline_mode = #tpu.pipeline_mode<synchronous>, transform_indices = @transform_3, window_bounds = array<i64: 16, 2>}]} {
    %c0 = arith.constant 0 : index
    %c0_0 = arith.constant 0 : index
    %0 = vector.load %arg1[%c0, %c0_0] : memref<16x32xf32, #tpu.memory_space<vmem>>, vector<16x32xf32>
    %c0_1 = arith.constant 0 : index
    %c0_2 = arith.constant 0 : index
    %1 = vector.load %arg2[%c0_1, %c0_2] : memref<32x2xf32, #tpu.memory_space<vmem>>, vector<32x2xf32>
    %cst = arith.constant dense<0.000000e+00> : vector<16x2xf32>
    %2 = tpu.matmul %0, %1, %cst {dimension_numbers = #tpu.dot_dimension_numbers<[1], [0], [0], [1], [0, 0, 1, 1], [], []>} : vector<16x32xf32>, vector<32x2xf32>, vector<16x2xf32> -> vector<16x2xf32>
    %c0_3 = arith.constant 0 : index
    %c0_4 = arith.constant 0 : index
    %3 = vector.load %arg3[%c0_3, %c0_4] : memref<1x2xf32, #tpu.memory_space<vmem>>, vector<1x2xf32>
    %4 = vector.broadcast %3 : vector<1x2xf32> to vector<16x2xf32>
    %5 = arith.addf %2, %4 : vector<16x2xf32>
    %c0_5 = arith.constant 0 : index
    %c0_6 = arith.constant 0 : index
    %6 = vector.load %arg4[%c0_5, %c0_6] : memref<16x2xf32, #tpu.memory_space<vmem>>, vector<16x2xf32>
    tpu.vector_store %arg4[%c0_5, %c0_6], %5 {strides = array<i32>} : memref<16x2xf32, #tpu.memory_space<vmem>>, vector<16x2xf32>,
    return
  }
  func.func @transform_0(%arg0: i32) -> (i32, i32) {
    %c0_i32 = arith.constant 0 : i32
    %c0_i32_0 = arith.constant 0 : i32
    %c0_i32_1 = arith.constant 0 : i32
    return %c0_i32, %c0_i32_0 : i32, i32
  }
  func.func @transform_1(%arg0: i32) -> (i32, i32) {
    %c0_i32 = arith.constant 0 : i32
    %c0_i32_0 = arith.constant 0 : i32
    %c0_i32_1 = arith.constant 0 : i32
    return %c0_i32, %c0_i32_0 : i32, i32
  }
  func.func @transform_2(%arg0: i32) -> (i32, i32) {
    %c0_i32 = arith.constant 0 : i32
    %c0_i32_0 = arith.constant 0 : i32
    %c0_i32_1 = arith.constant 0 : i32
    return %c0_i32, %c0_i32_0 : i32, i32
  }
  func.func @transform_3(%arg0: i32) -> (i32, i32) {
    %c0_i32 = arith.constant 0 : i32
    %c0_i32_0 = arith.constant 0 : i32
    %c0_i32_1 = arith.constant 0 : i32
    return %c0_i32, %c0_i32_0 : i32, i32
  }
}

</mosaic_0001>

<llo_original>
// kernel: bert_base_uncased_forward.7
$region0: #{bert_base_uncased_forward.7}
  #allocation0 [shape = 'u32[]', space=smem, size = 0x4, offset = 0x4, fixed_abs, tag = 'smem constant byte address 0x4 - core index']
  #allocation1 [shape = 'u32[144,128]{1,0:T(1,128)}', space=vmem, size = 0x12000, scoped, tag = 'internal scratch']
  %s0 = inlined_call_operand.vmem [shape: f32[16,32], index: 0, kind: input, shape index: {}]
  %s1 = inlined_call_operand.vmem [shape: f32[32,2], index: 1, kind: input, shape index: {}]
  %s2 = inlined_call_operand.vmem [shape: f32[1,2], index: 2, kind: input, shape index: {}]
  %s3 = inlined_call_operand.vmem [shape: f32[16,2], index: 3, kind: output, shape index: {}]
  %s4 = sld [smem:[#allocation0]]
  $region22: #{bert_base_uncased_forward.7} parent=0
    _
  %s6 = ssub.s32 1, %s4
  %s7 = scalar_select 0, %s6, %s4
  // Predicated region
  $region2: #{bert_base_uncased_forward.7} parent=0 // pred_check
    _
  $region3: #{bert_base_uncased_forward.7} parent=0 // pred_check_branch
    %9 = sbr.rel (0) target = $region5
  $region4: #{bert_base_uncased_forward.7} parent=0 // pred_region
    _
  $region5: #{bert_base_uncased_forward.7} parent=0 // pred_fallthru
    _
  // Predicated region
  $region6: #{bert_base_uncased_forward.7} parent=0 // pred_check
    _
  $region7: #{bert_base_uncased_forward.7} parent=0 // pred_check_branch
    %11 = sbr.rel (0) target = $region9
  $region8: #{bert_base_uncased_forward.7} parent=0 // pred_region
    _
  $region9: #{bert_base_uncased_forward.7} parent=0 // pred_fallthru
    _
  // Predicated region
  $region10: #{bert_base_uncased_forward.7} parent=0 // pred_check
    _
  $region11: #{bert_base_uncased_forward.7} parent=0 // pred_check_branch
    %13 = sbr.rel (0) target = $region13
  $region12: #{bert_base_uncased_forward.7} parent=0 // pred_region
    _
  $region13: #{bert_base_uncased_forward.7} parent=0 // pred_fallthru
    _
  %v14 = vld [vmem:[%s0] sm:$0xff]
  %v15 = vld [vmem:[%s0 + $0x8] sm:$0xff]
  %v16 = vld [vmem:[%s1] sm:$0xff]
  %v17 = vld [vmem:[%s1 + $0x8] sm:$0xff]
  %v18 = vld [vmem:[%s1 + $0x10] sm:$0xff]
  %v19 = vld [vmem:[%s1 + $0x18] sm:$0xff]
  %v20 = vld [vmem:[%s2] sm:$0x1]
  %v22 = vlaneseq
  %v23 = vshrl.u32 %v22, 7
  %v24 = vsub.s32 0, %v23
  %v25 = vrot.slane %v20, %v24
  %vm27 = vcmask 261120
  %v29 = vsel %vm27, %v14, 0
  %v32 = vsel %vm27, %v15, 0
  %34 = vmatprep.subr.mxu0 0.0
  %35 = vmatpush1.msra.mxu0 0.0
  %36 = vmatprep.subr.mxu0 0.0
  %37 = vmatpush1.msra.mxu0 0.0
  %38 = vmatprep.subr.mxu0 0.0
  %39 = vmatpush1.msra.mxu0 0.0
  %40 = vmatprep.subr.mxu0 0.0
  %41 = vmatpush1.msra.mxu0 0.0
  %42 = vmatprep.subr.mxu0 0.0
  %43 = vmatpush1.msra.mxu0 0.0
  %44 = vmatprep.subr.mxu0 0.0
  %45 = vmatpush1.msra.mxu0 0.0
  %46 = vmatprep.subr.mxu0 0.0
  %47 = vmatpush1.msra.mxu0 0.0
  %48 = vmatprep.subr.mxu0 0.0
  %49 = vmatpush1.msra.mxu0 0.0
  %50 = vmatprep.subr.mxu0 0.0
  %51 = vmatpush1.msra.mxu0 0.0
  %52 = vmatprep.subr.mxu0 0.0
  %53 = vmatpush1.msra.mxu0 0.0
  %54 = vmatprep.subr.mxu0 0.0
  %55 = vmatpush1.msra.mxu0 0.0
  %56 = vmatprep.subr.mxu0 0.0
  %57 = vmatpush1.msra.mxu0 0.0
  %58 = vmatprep.subr.mxu0 0.0
  %59 = vmatpush1.msra.mxu0 %v19
  %60 = vmatprep.subr.mxu0 0.0
  %61 = vmatpush1.msra.mxu0 %v18
  %62 = vmatprep.subr.mxu0 0.0
  %63 = vmatpush1.msra.mxu0 %v17
  %64 = vmatprep.subr.mxu0 0.0
  %65 = vmatpush1.msra.mxu0 %v16
  %66 = vmatprep.subr.mxu0 0.0
  %67 = vmatpush2.msra.mxu0 0.0
  %68 = vmatprep.subr.mxu0 0.0
  %69 = vmatpush2.msra.mxu0 0.0
  %70 = vmatprep.subr.mxu0 0.0
  %71 = vmatpush2.msra.mxu0 0.0
  %72 = vmatprep.subr.mxu0 0.0
  %73 = vmatpush2.msra.mxu0 0.0
  %74 = vmatprep.subr.mxu0 0.0
  %75 = vmatpush2.msra.mxu0 0.0
  %76 = vmatprep.subr.mxu0 0.0
  %77 = vmatpush2.msra.mxu0 0.0
  %78 = vmatprep.subr.mxu0 0.0
  %79 = vmatpush2.msra.mxu0 0.0
  %80 = vmatprep.subr.mxu0 0.0
  %81 = vmatpush2.msra.mxu0 0.0
  %82 = vmatprep.subr.mxu0 0.0
  %83 = vmatpush2.msra.mxu0 0.0
  %84 = vmatprep.subr.mxu0 0.0
  %85 = vmatpush2.msra.mxu0 0.0
  %86 = vmatprep.subr.mxu0 0.0
  %87 = vmatpush2.msra.mxu0 0.0
  %88 = vmatprep.subr.mxu0 0.0
  %89 = vmatpush2.msra.mxu0 0.0
  %90 = vmatprep.subr.mxu0 0.0
  %91 = vmatpush2.msra.mxu0 0.0
  %92 = vmatprep.subr.mxu0 0.0
  %93 = vmatpush2.msra.mxu0 0.0
  %94 = vmatprep.subr.mxu0 0.0
  %95 = vmatpush2.msra.mxu0 0.0
  %96 = vmatprep.subr.mxu0 0.0
  %97 = vmatpush2.msra.mxu0 0.0
  %98 = vmatprep.mubr.f32.mxu0 0.0
  %99 = vmatmul.mubr.f32.gmra.mxu0 %v29
  %v100 = vpop.f32.mrf.mxu0
  %v101 = vadd.f32 %v25, %v100
  %v102 = vpop.f32.mrf.mxu0
  %103 = vmatprep.mubr.f32.mxu0 0.0
  %104 = vmatmul.mubr.f32.gmra.mxu0 %v32
  %v105 = vpop.f32.mrf.mxu0
  %v106 = vadd.f32 %v25, %v105
  %v107 = vpop.f32.mrf.mxu0
  %108 = vdwg.mxu0
  %vm109 = vcmask 15360
  %110 = vst.msk [vmem:[%s3] sm:$0xff] %vm109, %v101
  %111 = vst.msk [vmem:[%s3 + $0x8] sm:$0xff] %vm109, %v106
  // Predicated region
  $region14: #{bert_base_uncased_forward.7} parent=0 // pred_check
    _
  $region15: #{bert_base_uncased_forward.7} parent=0 // pred_check_branch
    %113 = sbr.rel (0) target = $region17
  $region16: #{bert_base_uncased_forward.7} parent=0 // pred_region
    _
  $region17: #{bert_base_uncased_forward.7} parent=0 // pred_fallthru
    _
  // Predicated region
  $region18: #{bert_base_uncased_forward.7} parent=0 // pred_check
    _
  $region19: #{bert_base_uncased_forward.7} parent=0 // pred_check_branch
    %115 = sbr.rel (0) target = $region21
  $region20: #{bert_base_uncased_forward.7} parent=0 // pred_region
    _
  $region21: #{bert_base_uncased_forward.7} parent=0 // pred_fallthru
    _

// kernel: bert_base_uncased_forward.4
$region0: #{bert_base_uncased_forward.4}
  #allocation0 [shape = 'u32[]', space=smem, size = 0x4, offset = 0x4, fixed_abs, tag = 'smem constant byte address 0x4 - core index']
  #allocation1 [shape = 'u32[144,128]{1,0:T(1,128)}', space=vmem, size = 0x12000, scoped, tag = 'internal scratch']
  %s0 = inlined_call_operand.vmem [shape: f32[16,32], index: 0, kind: input, shape index: {}]
  %s1 = inlined_call_operand.vmem [shape: f32[1,32], index: 1, kind: input, shape index: {}]
  %s2 = inlined_call_operand.vmem [shape: f32[1,32], index: 2, kind: input, shape index: {}]
  %s3 = inlined_call_operand.vmem [shape: f32[16,32], index: 3, kind: output, shape index: {}]
  %s4 = sld [smem:[#allocation0]]
  $region22: #{bert_base_uncased_forward.4} parent=0
    _
  %s6 = ssub.s32 1, %s4
  %s7 = scalar_select 0, %s6, %s4
  // Predicated region
  $region2: #{bert_base_uncased_forward.4} parent=0 // pred_check
    _
  $region3: #{bert_base_uncased_forward.4} parent=0 // pred_check_branch
    %9 = sbr.rel (0) target = $region5
  $region4: #{bert_base_uncased_forward.4} parent=0 // pred_region
    _
  $region5: #{bert_base_uncased_forward.4} parent=0 // pred_fallthru
    _
  // Predicated region
  $region6: #{bert_base_uncased_forward.4} parent=0 // pred_check
    _
  $region7: #{bert_base_uncased_forward.4} parent=0 // pred_check_branch
    %11 = sbr.rel (0) target = $region9
  $region8: #{bert_base_uncased_forward.4} parent=0 // pred_region
    _
  $region9: #{bert_base_uncased_forward.4} parent=0 // pred_fallthru
    _
  // Predicated region
  $region10: #{bert_base_uncased_forward.4} parent=0 // pred_check
    _
  $region11: #{bert_base_uncased_forward.4} parent=0 // pred_check_branch
    %13 = sbr.rel (0) target = $region13
  $region12: #{bert_base_uncased_forward.4} parent=0 // pred_region
    _
  $region13: #{bert_base_uncased_forward.4} parent=0 // pred_fallthru
    _
  %v14 = vld [vmem:[%s0] sm:$0xff]
  %v15 = vld [vmem:[%s0 + $0x8] sm:$0xff]
  %v16 = vld [vmem:[%s1] sm:$0x1]
  %v17 = vld [vmem:[%s2] sm:$0x1]
  %vm18 = vcmask 261120
  %v19 = vsel %vm18, %v14, 0.0
  %20 = vadd.xlane.f32.xlu0 %v19
  %v21 = vpop.xlane.xlu0 %20
  %v22 = vsel %vm18, %v15, 0.0
  %23 = vadd.xlane.f32.xlu0 %v22
  %v24 = vpop.xlane.xlu0 %23
  %v25 = vrcp.pop 32.0
  %v26 = vmul.f32 %v21, %v25
  %v27 = vmul.f32 %v24, %v25
  %v28 = vsub.f32 %v14, %v26
  %v29 = vsub.f32 %v15, %v27
  %v30 = vmul.f32 %v28, %v28
  %v31 = vmul.f32 %v29, %v29
  %v32 = vsel %vm18, %v30, 0.0
  %33 = vadd.xlane.f32.xlu0 %v32
  %v34 = vpop.xlane.xlu0 %33
  %v35 = vsel %vm18, %v31, 0.0
  %36 = vadd.xlane.f32.xlu0 %v35
  %v37 = vpop.xlane.xlu0 %36
  %v38 = vmul.f32 %v34, %v25
  %v39 = vmul.f32 %v37, %v25
  %v40 = vadd.f32 %v38, 1e-12
  %v41 = vadd.f32 %v39, 1e-12
  %v42 = vrsqrt.pop %v40
  %v43 = vrsqrt.pop %v41
  %v44 = vmul.f32 %v28, %v42
  %v45 = vmul.f32 %v29, %v43
  %v47 = vlaneseq
  %v48 = vshrl.u32 %v47, 7
  %v49 = vsub.s32 0, %v48
  %v50 = vrot.slane %v16, %v49
  %v52 = vmul.f32 %v44, %v50
  %v53 = vmul.f32 %v45, %v50
  %v55 = vlaneseq
  %v56 = vshrl.u32 %v55, 7
  %v57 = vsub.s32 0, %v56
  %v58 = vrot.slane %v17, %v57
  %v60 = vadd.f32 %v52, %v58
  %v61 = vadd.f32 %v53, %v58
  %62 = vst.msk [vmem:[%s3] sm:$0xff] %vm18, %v60
  %63 = vst.msk [vmem:[%s3 + $0x8] sm:$0xff] %vm18, %v61
  // Predicated region
  $region14: #{bert_base_uncased_forward.4} parent=0 // pred_check
    _
  $region15: #{bert_base_uncased_forward.4} parent=0 // pred_check_branch
    %65 = sbr.rel (0) target = $region17
  $region16: #{bert_base_uncased_forward.4} parent=0 // pred_region
    _
  $region17: #{bert_base_uncased_forward.4} parent=0 // pred_fallthru
    _
  // Predicated region
  $region18: #{bert_base_uncased_forward.4} parent=0 // pred_check
    _
  $region19: #{bert_base_uncased_forward.4} parent=0 // pred_check_branch
    %67 = sbr.rel (0) target = $region21
  $region20: #{bert_base_uncased_forward.4} parent=0 // pred_region
    _
  $region21: #{bert_base_uncased_forward.4} parent=0 // pred_fallthru
    _

// kernel: bert_base_uncased_forward.5
$region0: #{bert_base_uncased_forward.5}
  #allocation0 [shape = 'u32[]', space=smem, size = 0x4, offset = 0x4, fixed_abs, tag = 'smem constant byte address 0x4 - core index']
  #allocation1 [shape = 'u32[144,128]{1,0:T(1,128)}', space=vmem, size = 0x12000, scoped, tag = 'internal scratch']
  %s0 = inlined_call_operand.vmem [shape: f32[2,8,32], index: 0, kind: input, shape index: {}]
  %s1 = inlined_call_operand.vmem [shape: f32[2,1,8], index: 1, kind: input, shape index: {}]
  %s2 = inlined_call_operand.vmem [shape: f32[32,96], index: 2, kind: input, shape index: {}]
  %s3 = inlined_call_operand.vmem [shape: f32[1,96], index: 3, kind: input, shape index: {}]
  %s4 = inlined_call_operand.vmem [shape: f32[32,32], index: 4, kind: input, shape index: {}]
  %s5 = inlined_call_operand.vmem [shape: f32[1,32], index: 5, kind: input, shape index: {}]
  %s6 = inlined_call_operand.vmem [shape: f32[1,32], index: 6, kind: input, shape index: {}]
  %s7 = inlined_call_operand.vmem [shape: f32[1,32], index: 7, kind: input, shape index: {}]
  %s8 = inlined_call_operand.vmem [shape: f32[32,64], index: 8, kind: input, shape index: {}]
  %s9 = inlined_call_operand.vmem [shape: f32[1,64], index: 9, kind: input, shape index: {}]
  %s10 = inlined_call_operand.vmem [shape: f32[64,32], index: 10, kind: input, shape index: {}]
  %s11 = inlined_call_operand.vmem [shape: f32[1,32], index: 11, kind: input, shape index: {}]
  %s12 = inlined_call_operand.vmem [shape: f32[1,32], index: 12, kind: input, shape index: {}]
  %s13 = inlined_call_operand.vmem [shape: f32[1,32], index: 13, kind: input, shape index: {}]
  %s14 = inlined_call_operand.vmem [shape: f32[2,8,32], index: 14, kind: output, shape index: {}]
  %s15 = sld [smem:[#allocation0]]
  $region89: #{bert_base_uncased_forward.5} parent=0
    _
  %s17 = ssub.s32 1, %s15
  %s18 = scalar_select 0, %s17, %s15
  loop: start=0, step=1, limit=4
  $region2: #{bert_base_uncased_forward.5} parent=0 // loop_pre_header
    _
  $region3: #{bert_base_uncased_forward.5} parent=0 // loop_header
    %s20 = sphi 0, %s24
    %p21 = scmp.ge.s32.totalorder %s20, 4
    %s30 = sphi 0, %s32
    %s33 = sphi 0, %s30
    %s34 = sphi 0, %s33
    %s50 = sphi 0, %s34
    %s56 = sphi 0, %s58
    %s59 = sphi 0, %s56
    %s60 = sphi 0, %s59
    %s76 = sphi 0, %s60
    %s80 = sphi 0, %s80
    %s82 = sphi 0, %s80
    %s83 = sphi 0, %s82
    %s97 = sphi 0, %s83
    %s101 = sphi 0, %s101
    %s103 = sphi 0, %s101
    %s104 = sphi 0, %s103
    %s118 = sphi 0, %s104
    %s122 = sphi 0, %s122
    %s124 = sphi 0, %s122
    %s125 = sphi 0, %s124
    %s139 = sphi 0, %s125
    %s143 = sphi 0, %s143
    %s145 = sphi 0, %s143
    %s146 = sphi 0, %s145
    %s160 = sphi 0, %s146
    %s164 = sphi 0, %s164
    %s166 = sphi 0, %s164
    %s167 = sphi 0, %s166
    %s181 = sphi 0, %s167
    %s185 = sphi 0, %s185
    %s187 = sphi 0, %s185
    %s188 = sphi 0, %s187
    %s202 = sphi 0, %s188
    %s206 = sphi 0, %s206
    %s208 = sphi 0, %s206
    %s209 = sphi 0, %s208
    %s223 = sphi 0, %s209
    %s227 = sphi 0, %s227
    %s229 = sphi 0, %s227
    %s230 = sphi 0, %s229
    %s244 = sphi 0, %s230
    %s248 = sphi 0, %s248
    %s250 = sphi 0, %s248
    %s251 = sphi 0, %s250
    %s265 = sphi 0, %s251
    %s269 = sphi 0, %s269
    %s271 = sphi 0, %s269
    %s272 = sphi 0, %s271
    %s286 = sphi 0, %s272
    %s290 = sphi 0, %s290
    %s292 = sphi 0, %s290
    %s293 = sphi 0, %s292
    %s307 = sphi 0, %s293
    %s311 = sphi 0, %s311
    %s313 = sphi 0, %s311
    %s314 = sphi 0, %s313
    %s328 = sphi 0, %s314
    %s334 = sphi 0, %s336
    %s337 = sphi 0, %s334
    %s338 = sphi 0, %s337
    %s354 = sphi 0, %s338
  $region4: #{bert_base_uncased_forward.5} parent=0 // loop_header_branch
    %23 = sbr.rel (%p21) target = $region8
  $region5: #{bert_base_uncased_forward.5} parent=0 // loop_body
    %s25 = ssub.s32 %s20, 1
    %s26 = ssub.s32 %s20, 2
    %s27 = sadd.s32 %s20, 1
    %s28 = ssub.s32 %s20, %s27
    %p29 = scmp.eq.s32.totalorder %s28, 0
    %s31 = sadd.s32 %s30, 1
    %s32 = scalar_select %p29, %s30, %s31
    %p35 = pneg %p29
    %p36 = scmp.eq.s32.totalorder %s20, 1
    %p37 = por %p35, %p36
    %p38 = scmp.ne.s32.totalorder %s30, %s33
    %p39 = scmp.eq.s32.totalorder %s20, 0
    %p40 = por %p38, %p39
    %p41 = scmp.ne.s32.totalorder %s30, %s33
    %p42 = scmp.eq.s32.totalorder %s25, 1
    %p43 = por %p41, %p42
    %p44 = scmp.ne.s32.totalorder %s33, %s34
    %p45 = scmp.eq.s32.totalorder %s25, 0
    %p46 = por %p44, %p45
    %p47 = scmp.ne.s32.totalorder %s33, %s34
    %p48 = scmp.eq.s32.totalorder %s26, 1
    %p49 = por %p47, %p48
    %p51 = scmp.ne.s32.totalorder %s34, %s50
    %p52 = scmp.eq.s32.totalorder %s26, 0
    %p53 = por %p51, %p52
    %s54 = ssub.s32 %s20, %s27
    %p55 = scmp.eq.s32.totalorder %s54, 0
    %s57 = sadd.s32 %s56, 1
    %s58 = scalar_select %p55, %s56, %s57
    %p61 = pneg %p55
    %p62 = scmp.eq.s32.totalorder %s20, 1
    %p63 = por %p61, %p62
    %p64 = scmp.ne.s32.totalorder %s56, %s59
    %p65 = scmp.eq.s32.totalorder %s20, 0
    %p66 = por %p64, %p65
    %p67 = scmp.ne.s32.totalorder %s56, %s59
    %p68 = scmp.eq.s32.totalorder %s25, 1
    %p69 = por %p67, %p68
    %p70 = scmp.ne.s32.totalorder %s59, %s60
    %p71 = scmp.eq.s32.totalorder %s25, 0
    %p72 = por %p70, %p71
    %p73 = scmp.ne.s32.totalorder %s59, %s60
    %p74 = scmp.eq.s32.totalorder %s26, 1
    %p75 = por %p73, %p74
    %p77 = scmp.ne.s32.totalorder %s60, %s76
    %p78 = scmp.eq.s32.totalorder %s26, 0
    %p79 = por %p77, %p78
    %s81 = sadd.s32 %s80, 1
    %p84 = scmp.eq.s32.totalorder %s20, 1
    %p85 = scmp.ne.s32.totalorder %s80, %s82
    %p86 = scmp.eq.s32.totalorder %s20, 0
    %p87 = por %p85, %p86
    %p88 = scmp.ne.s32.totalorder %s80, %s82
    %p89 = scmp.eq.s32.totalorder %s25, 1
    %p90 = por %p88, %p89
    %p91 = scmp.ne.s32.totalorder %s82, %s83
    %p92 = scmp.eq.s32.totalorder %s25, 0
    %p93 = por %p91, %p92
    %p94 = scmp.ne.s32.totalorder %s82, %s83
    %p95 = scmp.eq.s32.totalorder %s26, 1
    %p96 = por %p94, %p95
    %p98 = scmp.ne.s32.totalorder %s83, %s97
    %p99 = scmp.eq.s32.totalorder %s26, 0
    %p100 = por %p98, %p99
    %s102 = sadd.s32 %s101, 1
    %p105 = scmp.eq.s32.totalorder %s20, 1
    %p106 = scmp.ne.s32.totalorder %s101, %s103
    %p107 = scmp.eq.s32.totalorder %s20, 0
    %p108 = por %p106, %p107
    %p109 = scmp.ne.s32.totalorder %s101, %s103
    %p110 = scmp.eq.s32.totalorder %s25, 1
    %p111 = por %p109, %p110
    %p112 = scmp.ne.s32.totalorder %s103, %s104
    %p113 = scmp.eq.s32.totalorder %s25, 0
    %p114 = por %p112, %p113
    %p115 = scmp.ne.s32.totalorder %s103, %s104
    %p116 = scmp.eq.s32.totalorder %s26, 1
    %p117 = por %p115, %p116
    %p119 = scmp.ne.s32.totalorder %s104, %s118
    %p120 = scmp.eq.s32.totalorder %s26, 0
    %p121 = por %p119, %p120
    %s123 = sadd.s32 %s122, 1
    %p126 = scmp.eq.s32.totalorder %s20, 1
    %p127 = scmp.ne.s32.totalorder %s122, %s124
    %p128 = scmp.eq.s32.totalorder %s20, 0
    %p129 = por %p127, %p128
    %p130 = scmp.ne.s32.totalorder %s122, %s124
    %p131 = scmp.eq.s32.totalorder %s25, 1
    %p132 = por %p130, %p131
    %p133 = scmp.ne.s32.totalorder %s124, %s125
    %p134 = scmp.eq.s32.totalorder %s25, 0
    %p135 = por %p133, %p134
    %p136 = scmp.ne.s32.totalorder %s124, %s125
    %p137 = scmp.eq.s32.totalorder %s26, 1
    %p138 = por %p136, %p137
    %p140 = scmp.ne.s32.totalorder %s125, %s139
    %p141 = scmp.eq.s32.totalorder %s26, 0
    %p142 = por %p140, %p141
    %s144 = sadd.s32 %s143, 1
    %p147 = scmp.eq.s32.totalorder %s20, 1
    %p148 = scmp.ne.s32.totalorder %s143, %s145
    %p149 = scmp.eq.s32.totalorder %s20, 0
    %p150 = por %p148, %p149
    %p151 = scmp.ne.s32.totalorder %s143, %s145
    %p152 = scmp.eq.s32.totalorder %s25, 1
    %p153 = por %p151, %p152
    %p154 = scmp.ne.s32.totalorder %s145, %s146
    %p155 = scmp.eq.s32.totalorder %s25, 0
    %p156 = por %p154, %p155
    %p157 = scmp.ne.s32.totalorder %s145, %s146
    %p158 = scmp.eq.s32.totalorder %s26, 1
    %p159 = por %p157, %p158
    %p161 = scmp.ne.s32.totalorder %s146, %s160
    %p162 = scmp.eq.s32.totalorder %s26, 0
    %p163 = por %p161, %p162
    %s165 = sadd.s32 %s164, 1
    %p168 = scmp.eq.s32.totalorder %s20, 1
    %p169 = scmp.ne.s32.totalorder %s164, %s166
    %p170 = scmp.eq.s32.totalorder %s20, 0
    %p171 = por %p169, %p170
    %p172 = scmp.ne.s32.totalorder %s164, %s166
    %p173 = scmp.eq.s32.totalorder %s25, 1
    %p174 = por %p172, %p173
    %p175 = scmp.ne.s32.totalorder %s166, %s167
    %p176 = scmp.eq.s32.totalorder %s25, 0
    %p177 = por %p175, %p176
    %p178 = scmp.ne.s32.totalorder %s166, %s167
    %p179 = scmp.eq.s32.totalorder %s26, 1
    %p180 = por %p178, %p179
    %p182 = scmp.ne.s32.totalorder %s167, %s181
    %p183 = scmp.eq.s32.totalorder %s26, 0
    %p184 = por %p182, %p183
    %s186 = sadd.s32 %s185, 1
    %p189 = scmp.eq.s32.totalorder %s20, 1
    %p190 = scmp.ne.s32.totalorder %s185, %s187
    %p191 = scmp.eq.s32.totalorder %s20, 0
    %p192 = por %p190, %p191
    %p193 = scmp.ne.s32.totalorder %s185, %s187
    %p194 = scmp.eq.s32.totalorder %s25, 1
    %p195 = por %p193, %p194
    %p196 = scmp.ne.s32.totalorder %s187, %s188
    %p197 = scmp.eq.s32.totalorder %s25, 0
    %p198 = por %p196, %p197
    %p199 = scmp.ne.s32.totalorder %s187, %s188
    %p200 = scmp.eq.s32.totalorder %s26, 1
    %p201 = por %p199, %p200
    %p203 = scmp.ne.s32.totalorder %s188, %s202
    %p204 = scmp.eq.s32.totalorder %s26, 0
    %p205 = por %p203, %p204
    %s207 = sadd.s32 %s206, 1
    %p210 = scmp.eq.s32.totalorder %s20, 1
    %p211 = scmp.ne.s32.totalorder %s206, %s208
    %p212 = scmp.eq.s32.totalorder %s20, 0
    %p213 = por %p211, %p212
    %p214 = scmp.ne.s32.totalorder %s206, %s208
    %p215 = scmp.eq.s32.totalorder %s25, 1
    %p216 = por %p214, %p215
    %p217 = scmp.ne.s32.totalorder %s208, %s209
    %p218 = scmp.eq.s32.totalorder %s25, 0
    %p219 = por %p217, %p218
    %p220 = scmp.ne.s32.totalorder %s208, %s209
    %p221 = scmp.eq.s32.totalorder %s26, 1
    %p222 = por %p220, %p221
    %p224 = scmp.ne.s32.totalorder %s209, %s223
    %p225 = scmp.eq.s32.totalorder %s26, 0
    %p226 = por %p224, %p225
    %s228 = sadd.s32 %s227, 1
    %p231 = scmp.eq.s32.totalorder %s20, 1
    %p232 = scmp.ne.s32.totalorder %s227, %s229
    %p233 = scmp.eq.s32.totalorder %s20, 0
    %p234 = por %p232, %p233
    %p235 = scmp.ne.s32.totalorder %s227, %s229
    %p236 = scmp.eq.s32.totalorder %s25, 1
    %p237 = por %p235, %p236
    %p238 = scmp.ne.s32.totalorder %s229, %s230
    %p239 = scmp.eq.s32.totalorder %s25, 0
    %p240 = por %p238, %p239
    %p241 = scmp.ne.s32.totalorder %s229, %s230
    %p242 = scmp.eq.s32.totalorder %s26, 1
    %p243 = por %p241, %p242
    %p245 = scmp.ne.s32.totalorder %s230, %s244
    %p246 = scmp.eq.s32.totalorder %s26, 0
    %p247 = por %p245, %p246
    %s249 = sadd.s32 %s248, 1
    %p252 = scmp.eq.s32.totalorder %s20, 1
    %p253 = scmp.ne.s32.totalorder %s248, %s250
    %p254 = scmp.eq.s32.totalorder %s20, 0
    %p255 = por %p253, %p254
    %p256 = scmp.ne.s32.totalorder %s248, %s250
    %p257 = scmp.eq.s32.totalorder %s25, 1
    %p258 = por %p256, %p257
    %p259 = scmp.ne.s32.totalorder %s250, %s251
    %p260 = scmp.eq.s32.totalorder %s25, 0
    %p261 = por %p259, %p260
    %p262 = scmp.ne.s32.totalorder %s250, %s251
    %p263 = scmp.eq.s32.totalorder %s26, 1
    %p264 = por %p262, %p263
    %p266 = scmp.ne.s32.totalorder %s251, %s265
    %p267 = scmp.eq.s32.totalorder %s26, 0
    %p268 = por %p266, %p267
    %s270 = sadd.s32 %s269, 1
    %p273 = scmp.eq.s32.totalorder %s20, 1
    %p274 = scmp.ne.s32.totalorder %s269, %s271
    %p275 = scmp.eq.s32.totalorder %s20, 0
    %p276 = por %p274, %p275
    %p277 = scmp.ne.s32.totalorder %s269, %s271
    %p278 = scmp.eq.s32.totalorder %s25, 1
    %p279 = por %p277, %p278
    %p280 = scmp.ne.s32.totalorder %s271, %s272
    %p281 = scmp.eq.s32.totalorder %s25, 0
    %p282 = por %p280, %p281
    %p283 = scmp.ne.s32.totalorder %s271, %s272
    %p284 = scmp.eq.s32.totalorder %s26, 1
    %p285 = por %p283, %p284
    %p287 = scmp.ne.s32.totalorder %s272, %s286
    %p288 = scmp.eq.s32.totalorder %s26, 0
    %p289 = por %p287, %p288
    %s291 = sadd.s32 %s290, 1
    %p294 = scmp.eq.s32.totalorder %s20, 1
    %p295 = scmp.ne.s32.totalorder %s290, %s292
    %p296 = scmp.eq.s32.totalorder %s20, 0
    %p297 = por %p295, %p296
    %p298 = scmp.ne.s32.totalorder %s290, %s292
    %p299 = scmp.eq.s32.totalorder %s25, 1
    %p300 = por %p298, %p299
    %p301 = scmp.ne.s32.totalorder %s292, %s293
    %p302 = scmp.eq.s32.totalorder %s25, 0
    %p303 = por %p301, %p302
    %p304 = scmp.ne.s32.totalorder %s292, %s293
    %p305 = scmp.eq.s32.totalorder %s26, 1
    %p306 = por %p304, %p305
    %p308 = scmp.ne.s32.totalorder %s293, %s307
    %p309 = scmp.eq.s32.totalorder %s26, 0
    %p310 = por %p308, %p309
    %s312 = sadd.s32 %s311, 1
    %p315 = scmp.eq.s32.totalorder %s20, 1
    %p316 = scmp.ne.s32.totalorder %s311, %s313
    %p317 = scmp.eq.s32.totalorder %s20, 0
    %p318 = por %p316, %p317
    %p319 = scmp.ne.s32.totalorder %s311, %s313
    %p320 = scmp.eq.s32.totalorder %s25, 1
    %p321 = por %p319, %p320
    %p322 = scmp.ne.s32.totalorder %s313, %s314
    %p323 = scmp.eq.s32.totalorder %s25, 0
    %p324 = por %p322, %p323
    %p325 = scmp.ne.s32.totalorder %s313, %s314
    %p326 = scmp.eq.s32.totalorder %s26, 1
    %p327 = por %p325, %p326
    %p329 = scmp.ne.s32.totalorder %s314, %s328
    %p330 = scmp.eq.s32.totalorder %s26, 0
    %p331 = por %p329, %p330
    %s332 = ssub.s32 %s20, %s27
    %p333 = scmp.eq.s32.totalorder %s332, 0
    %s335 = sadd.s32 %s334, 1
    %s336 = scalar_select %p333, %s334, %s335
    %p339 = pneg %p333
    %p340 = scmp.eq.s32.totalorder %s20, 1
    %p341 = por %p339, %p340
    %p342 = scmp.ne.s32.totalorder %s334, %s337
    %p343 = scmp.eq.s32.totalorder %s20, 0
    %p344 = por %p342, %p343
    %p345 = scmp.ne.s32.totalorder %s334, %s337
    %p346 = scmp.eq.s32.totalorder %s25, 1
    %p347 = por %p345, %p346
    %p348 = scmp.ne.s32.totalorder %s337, %s338
    %p349 = scmp.eq.s32.totalorder %s25, 0
    %p350 = por %p348, %p349
    %p351 = scmp.ne.s32.totalorder %s337, %s338
    %p352 = scmp.eq.s32.totalorder %s26, 1
    %p353 = por %p351, %p352
    %p355 = scmp.ne.s32.totalorder %s338, %s354
    %p356 = scmp.eq.s32.totalorder %s26, 0
    %p357 = por %p355, %p356
    %p358 = scmp.le.s32.totalorder 1, %s20
    %p359 = scmp.lt.s32.totalorder %s20, 3
    %p360 = pnand %p358, %p359
    %p361 = pneg %p360
    // Predicated region
    $region9: #{bert_base_uncased_forward.5} parent=5 // pred_check
      _
    $region10: #{bert_base_uncased_forward.5} parent=5 // pred_check_branch
      %363 = sbr.rel (%p360) target = $region12
    $region11: #{bert_base_uncased_forward.5} parent=5 // pred_region
      %s364 = ssub.s32 %s20, 1
      // Predicated region
      $region13: #{bert_base_uncased_forward.5} parent=11 // pred_check
        %p365 = pneg %p93
      $region14: #{bert_base_uncased_forward.5} parent=11 // pred_check_branch
        %367 = sbr.rel (%p365) target = $region16
      $region15: #{bert_base_uncased_forward.5} parent=11 // pred_region
        _
      $region16: #{bert_base_uncased_forward.5} parent=11 // pred_fallthru
        _
      // Predicated region
      $region17: #{bert_base_uncased_forward.5} parent=11 // pred_check
        %p368 = pneg %p114
      $region18: #{bert_base_uncased_forward.5} parent=11 // pred_check_branch
        %370 = sbr.rel (%p368) target = $region20
      $region19: #{bert_base_uncased_forward.5} parent=11 // pred_region
        _
      $region20: #{bert_base_uncased_forward.5} parent=11 // pred_fallthru
        _
      // Predicated region
      $region21: #{bert_base_uncased_forward.5} parent=11 // pred_check
        %p371 = pneg %p135
      $region22: #{bert_base_uncased_forward.5} parent=11 // pred_check_branch
        %373 = sbr.rel (%p371) target = $region24
      $region23: #{bert_base_uncased_forward.5} parent=11 // pred_region
        _
      $region24: #{bert_base_uncased_forward.5} parent=11 // pred_fallthru
        _
      // Predicated region
      $region25: #{bert_base_uncased_forward.5} parent=11 // pred_check
        %p374 = pneg %p156
      $region26: #{bert_base_uncased_forward.5} parent=11 // pred_check_branch
        %376 = sbr.rel (%p374) target = $region28
      $region27: #{bert_base_uncased_forward.5} parent=11 // pred_region
        _
      $region28: #{bert_base_uncased_forward.5} parent=11 // pred_fallthru
        _
      // Predicated region
      $region29: #{bert_base_uncased_forward.5} parent=11 // pred_check
        %p377 = pneg %p177
      $region30: #{bert_base_uncased_forward.5} parent=11 // pred_check_branch
        %379 = sbr.rel (%p377) target = $region32
      $region31: #{bert_base_uncased_forward.5} parent=11 // pred_region
        _
      $region32: #{bert_base_uncased_forward.5} parent=11 // pred_fallthru
        _
      // Predicated region
      $region33: #{bert_base_uncased_forward.5} parent=11 // pred_check
        %p380 = pneg %p198
      $region34: #{bert_base_uncased_forward.5} parent=11 // pred_check_branch
        %382 = sbr.rel (%p380) target = $region36
      $region35: #{bert_base_uncased_forward.5} parent=11 // pred_region
        _
      $region36: #{bert_base_uncased_forward.5} parent=11 // pred_fallthru
        _
      // Predicated region
      $region37: #{bert_base_uncased_forward.5} parent=11 // pred_check
        %p383 = pneg %p219
      $region38: #{bert_base_uncased_forward.5} parent=11 // pred_check_branch
        %385 = sbr.rel (%p383) target = $region40
      $region39: #{bert_base_uncased_forward.5} parent=11 // pred_region
        _
      $region40: #{bert_base_uncased_forward.5} parent=11 // pred_fallthru
        _
      // Predicated region
      $region41: #{bert_base_uncased_forward.5} parent=11 // pred_check
        %p386 = pneg %p240
      $region42: #{bert_base_uncased_forward.5} parent=11 // pred_check_branch
        %388 = sbr.rel (%p386) target = $region44
      $region43: #{bert_base_uncased_forward.5} parent=11 // pred_region
        _
      $region44: #{bert_base_uncased_forward.5} parent=11 // pred_fallthru
        _
      // Predicated region
      $region45: #{bert_base_uncased_forward.5} parent=11 // pred_check
        %p389 = pneg %p261
      $region46: #{bert_base_uncased_forward.5} parent=11 // pred_check_branch
        %391 = sbr.rel (%p389) target = $region48
      $region47: #{bert_base_uncased_forward.5} parent=11 // pred_region
        _
      $region48: #{bert_base_uncased_forward.5} parent=11 // pred_fallthru
        _
      // Predicated region
      $region49: #{bert_base_uncased_forward.5} parent=11 // pred_check
        %p392 = pneg %p282
      $region50: #{bert_base_uncased_forward.5} parent=11 // pred_check_branch
        %394 = sbr.rel (%p392) target = $region52
      $region51: #{bert_base_uncased_forward.5} parent=11 // pred_region
        _
      $region52: #{bert_base_uncased_forward.5} parent=11 // pred_fallthru
        _
      // Predicated region
      $region53: #{bert_base_uncased_forward.5} parent=11 // pred_check
        %p395 = pneg %p303
      $region54: #{bert_base_uncased_forward.5} parent=11 // pred_check_branch
        %397 = sbr.rel (%p395) target = $region56
      $region55: #{bert_base_uncased_forward.5} parent=11 // pred_region
        _
      $region56: #{bert_base_uncased_forward.5} parent=11 // pred_fallthru
        _
      // Predicated region
      $region57: #{bert_base_uncased_forward.5} parent=11 // pred_check
        %p398 = pneg %p324
      $region58: #{bert_base_uncased_forward.5} parent=11 // pred_check_branch
        %400 = sbr.rel (%p398) target = $region60
      $region59: #{bert_base_uncased_forward.5} parent=11 // pred_region
        _
      $region60: #{bert_base_uncased_forward.5} parent=11 // pred_fallthru
        _
    $region12: #{bert_base_uncased_forward.5} parent=5 // pred_fallthru
      _
    %p401 = scmp.lt.s32.totalorder %s20, 2
    // Predicated region
    $region61: #{bert_base_uncased_forward.5} parent=5 // pred_check
      %p402 = pneg %p401
    $region62: #{bert_base_uncased_forward.5} parent=5 // pred_check_branch
      %404 = sbr.rel (%p402) target = $region64
    $region63: #{bert_base_uncased_forward.5} parent=5 // pred_region
      // Predicated region
      $region65: #{bert_base_uncased_forward.5} parent=63 // pred_check
        %p405 = pneg %p40
      $region66: #{bert_base_uncased_forward.5} parent=63 // pred_check_branch
        %407 = sbr.rel (%p405) target = $region68
      $region67: #{bert_base_uncased_forward.5} parent=63 // pred_region
        %p408 = scmp.lt.s32.totalorder %s20, 1
        %s409 = scalar_select %p408, %s20, 1
        %s410 = smul.addr %s409, 8
        %s411 = scalar_lea.vmem %s0, %s410
      $region68: #{bert_base_uncased_forward.5} parent=63 // pred_fallthru
        _
      // Predicated region
      $region69: #{bert_base_uncased_forward.5} parent=63 // pred_check
        %p412 = pneg %p66
      $region70: #{bert_base_uncased_forward.5} parent=63 // pred_check_branch
        %414 = sbr.rel (%p412) target = $region72
      $region71: #{bert_base_uncased_forward.5} parent=63 // pred_region
        %p415 = scmp.lt.s32.totalorder %s20, 1
        %s416 = scalar_select %p415, %s20, 1
        %s417 = scalar_lea.vmem %s1, %s416
      $region72: #{bert_base_uncased_forward.5} parent=63 // pred_fallthru
        _
    $region64: #{bert_base_uncased_forward.5} parent=5 // pred_fallthru
      _
    %p418 = scmp.le.s32.totalorder 1, %s20
    %p419 = scmp.lt.s32.totalorder %s20, 3
    %p420 = pnand %p418, %p419
    %p421 = pneg %p420
    // Predicated region
    $region73: #{bert_base_uncased_forward.5} parent=5 // pred_check
      _
    $region74: #{bert_base_uncased_forward.5} parent=5 // pred_check_branch
      %423 = sbr.rel (%p420) target = $region76
    $region75: #{bert_base_uncased_forward.5} parent=5 // pred_region
      %s424 = ssub.s32 %s20, 1
      %p425 = scmp.lt.s32.totalorder %s25, 1
      %s426 = scalar_select %p425, %s25, 1
      %s427 = smul.addr %s426, 8
      %s428 = scalar_lea.vmem %s0, %s427
      %p429 = pneg %p46
      %p430 = pneg %p43
      %p431 = scmp.lt.s32.totalorder %s25, 1
      %s432 = scalar_select %p431, %s25, 1
      %s433 = scalar_lea.vmem %s1, %s432
      %p434 = pneg %p72
      %p435 = pneg %p69
      %p436 = pneg %p93
      %p437 = pneg %p90
      %p438 = pneg %p114
      %p439 = pneg %p111
      %p440 = pneg %p135
      %p441 = pneg %p132
      %p442 = pneg %p156
      %p443 = pneg %p153
      %p444 = pneg %p177
      %p445 = pneg %p174
      %p446 = pneg %p198
      %p447 = pneg %p195
      %p448 = pneg %p219
      %p449 = pneg %p216
      %p450 = pneg %p240
      %p451 = pneg %p237
      %p452 = pneg %p261
      %p453 = pneg %p258
      %p454 = pneg %p282
      %p455 = pneg %p279
      %p456 = pneg %p303
      %p457 = pneg %p300
      %p458 = pneg %p324
      %p459 = pneg %p321
      %p460 = pneg %p350
      %p461 = pneg %p347
      %p462 = scmp.lt.s32.totalorder %s25, 1
      %s463 = scalar_select %p462, %s25, 1
      %s464 = smul.addr %s463, 8
      %s465 = scalar_lea.vmem %s14, %s464
      %p466 = scmp.lt.s32.totalorder %s25, 1
      %s467 = scalar_select %p466, %s25, 1
      %s468 = smul.addr %s467, 8
      %s469 = scalar_lea.vmem %s0, %s468
      %p470 = scmp.lt.s32.totalorder %s25, 1
      %s471 = scalar_select %p470, %s25, 1
      %s472 = scalar_lea.vmem %s1, %s471
      %p473 = scmp.lt.s32.totalorder %s25, 1
      %s474 = scalar_select %p473, %s25, 1
      %s475 = smul.addr %s474, 8
      %s476 = scalar_lea.vmem %s14, %s475
      %v477 = vld [vmem:[%s469] sm:$0xff]
      %v478 = vld [vmem:[%s472] sm:$0x1]
      %v479 = vld [vmem:[%s2] sm:$0xff]
      %v480 = vld [vmem:[%s2 + $0x8] sm:$0xff]
      %v481 = vld [vmem:[%s2 + $0x10] sm:$0xff]
      %v482 = vld [vmem:[%s2 + $0x18] sm:$0xff]
      %v483 = vld [vmem:[%s3] sm:$0x1]
      %v485 = vlaneseq
      %v486 = vshrl.u32 %v485, 7
      %v487 = vsub.s32 0, %v486
      %v488 = vrot.slane %v483, %v487
      %vm490 = vcmask 261120
      %v492 = vsel %vm490, %v477, 0
      %494 = vmatprep.subr.mxu0 0.0
      %495 = vmatpush1.msra.mxu0 0.0
      %496 = vmatprep.subr.mxu0 0.0
      %497 = vmatpush1.msra.mxu0 0.0
      %498 = vmatprep.subr.mxu0 0.0
      %499 = vmatpush1.msra.mxu0 0.0
      %500 = vmatprep.subr.mxu0 0.0
      %501 = vmatpush1.msra.mxu0 0.0
      %502 = vmatprep.subr.mxu0 0.0
      %503 = vmatpush1.msra.mxu0 0.0
      %504 = vmatprep.subr.mxu0 0.0
      %505 = vmatpush1.msra.mxu0 0.0
      %506 = vmatprep.subr.mxu0 0.0
      %507 = vmatpush1.msra.mxu0 0.0
      %508 = vmatprep.subr.mxu0 0.0
      %509 = vmatpush1.msra.mxu0 0.0
      %510 = vmatprep.subr.mxu0 0.0
      %511 = vmatpush1.msra.mxu0 0.0
      %512 = vmatprep.subr.mxu0 0.0
      %513 = vmatpush1.msra.mxu0 0.0
      %514 = vmatprep.subr.mxu0 0.0
      %515 = vmatpush1.msra.mxu0 0.0
      %516 = vmatprep.subr.mxu0 0.0
      %517 = vmatpush1.msra.mxu0 0.0
      %518 = vmatprep.subr.mxu0 0.0
      %519 = vmatpush1.msra.mxu0 %v482
      %520 = vmatprep.subr.mxu0 0.0
      %521 = vmatpush1.msra.mxu0 %v481
      %522 = vmatprep.subr.mxu0 0.0
      %523 = vmatpush1.msra.mxu0 %v480
      %524 = vmatprep.subr.mxu0 0.0
      %525 = vmatpush1.msra.mxu0 %v479
      %526 = vmatprep.subr.mxu0 0.0
      %527 = vmatpush2.msra.mxu0 0.0
      %528 = vmatprep.subr.mxu0 0.0
      %529 = vmatpush2.msra.mxu0 0.0
      %530 = vmatprep.subr.mxu0 0.0
      %531 = vmatpush2.msra.mxu0 0.0
      %532 = vmatprep.subr.mxu0 0.0
      %533 = vmatpush2.msra.mxu0 0.0
      %534 = vmatprep.subr.mxu0 0.0
      %535 = vmatpush2.msra.mxu0 0.0
      %536 = vmatprep.subr.mxu0 0.0
      %537 = vmatpush2.msra.mxu0 0.0
      %538 = vmatprep.subr.mxu0 0.0
      %539 = vmatpush2.msra.mxu0 0.0
      %540 = vmatprep.subr.mxu0 0.0
      %541 = vmatpush2.msra.mxu0 0.0
      %542 = vmatprep.subr.mxu0 0.0
      %543 = vmatpush2.msra.mxu0 0.0
      %544 = vmatprep.subr.mxu0 0.0
      %545 = vmatpush2.msra.mxu0 0.0
      %546 = vmatprep.subr.mxu0 0.0
      %547 = vmatpush2.msra.mxu0 0.0
      %548 = vmatprep.subr.mxu0 0.0
      %549 = vmatpush2.msra.mxu0 0.0
      %550 = vmatprep.subr.mxu0 0.0
      %551 = vmatpush2.msra.mxu0 0.0
      %552 = vmatprep.subr.mxu0 0.0
      %553 = vmatpush2.msra.mxu0 0.0
      %554 = vmatprep.subr.mxu0 0.0
      %555 = vmatpush2.msra.mxu0 0.0
      %556 = vmatprep.subr.mxu0 0.0
      %557 = vmatpush2.msra.mxu0 0.0
      %558 = vmatprep.mubr.f32.mxu0 0.0
      %559 = vmatmul.mubr.f32.gmra.mxu0 %v492
      %v560 = vpop.f32.mrf.mxu0
      %v561 = vadd.f32 %v488, %v560
      %v562 = vpop.f32.mrf.mxu0
      %563 = vdwg.mxu0
      %v564 = vld [vmem:[%s5] sm:$0x1]
      %v566 = vlaneseq
      %v567 = vshrl.u32 %v566, 7
      %v568 = vsub.s32 0, %v567
      %v569 = vrot.slane %v564, %v568
      %v571 = vadd.f32 %v477, %v569
      %v572 = vmul.f32 %v561, 0.35355338
      %v574 = vlaneseq
      %v575 = vshrl.u32 %v574, 7
      %v576 = vsub.s32 0, %v575
      %v577 = vrot.slane %v478, %v576
      %580 = vrot.lane.b32.xlu0 %v561, 96
      %v581 = vpop.permute.xlu0 %580
      %vm582 = vcmask 64512
      %v584 = vsel %vm582, %v572, 0
      %v586 = vsel %vm582, %v581, 0
      %588 = vmatprep.subr.mxu0 0.0
      %589 = vmatpush1.xpose.msra.mxu0 0.0
      %590 = vmatprep.subr.mxu0 0.0
      %591 = vmatpush1.xpose.msra.mxu0 0.0
      %592 = vmatprep.subr.mxu0 0.0
      %593 = vmatpush1.xpose.msra.mxu0 0.0
      %594 = vmatprep.subr.mxu0 0.0
      %595 = vmatpush1.xpose.msra.mxu0 0.0
      %596 = vmatprep.subr.mxu0 0.0
      %597 = vmatpush1.xpose.msra.mxu0 0.0
      %598 = vmatprep.subr.mxu0 0.0
      %599 = vmatpush1.xpose.msra.mxu0 0.0
      %600 = vmatprep.subr.mxu0 0.0
      %601 = vmatpush1.xpose.msra.mxu0 0.0
      %602 = vmatprep.subr.mxu0 0.0
      %603 = vmatpush1.xpose.msra.mxu0 0.0
      %604 = vmatprep.subr.mxu0 0.0
      %605 = vmatpush1.xpose.msra.mxu0 0.0
      %606 = vmatprep.subr.mxu0 0.0
      %607 = vmatpush1.xpose.msra.mxu0 0.0
      %608 = vmatprep.subr.mxu0 0.0
      %609 = vmatpush1.xpose.msra.mxu0 0.0
      %610 = vmatprep.subr.mxu0 0.0
      %611 = vmatpush1.xpose.msra.mxu0 0.0
      %612 = vmatprep.subr.mxu0 0.0
      %613 = vmatpush1.xpose.msra.mxu0 0.0
      %614 = vmatprep.subr.mxu0 0.0
      %615 = vmatpush1.xpose.msra.mxu0 0.0
      %616 = vmatprep.subr.mxu0 0.0
      %617 = vmatpush1.xpose.msra.mxu0 0.0
      %618 = vmatprep.subr.mxu0 0.0
      %619 = vmatpush1.xpose.msra.mxu0 %v586
      %620 = vmatprep.subr.mxu0 0.0
      %621 = vmatpush2.xpose.msra.mxu0 0.0
      %622 = vmatprep.subr.mxu0 0.0
      %623 = vmatpush2.xpose.msra.mxu0 0.0
      %624 = vmatprep.subr.mxu0 0.0
      %625 = vmatpush2.xpose.msra.mxu0 0.0
      %626 = vmatprep.subr.mxu0 0.0
      %627 = vmatpush2.xpose.msra.mxu0 0.0
      %628 = vmatprep.subr.mxu0 0.0
      %629 = vmatpush2.xpose.msra.mxu0 0.0
      %630 = vmatprep.subr.mxu0 0.0
      %631 = vmatpush2.xpose.msra.mxu0 0.0
      %632 = vmatprep.subr.mxu0 0.0
      %633 = vmatpush2.xpose.msra.mxu0 0.0
      %634 = vmatprep.subr.mxu0 0.0
      %635 = vmatpush2.xpose.msra.mxu0 0.0
      %636 = vmatprep.subr.mxu0 0.0
      %637 = vmatpush2.xpose.msra.mxu0 0.0
      %638 = vmatprep.subr.mxu0 0.0
      %639 = vmatpush2.xpose.msra.mxu0 0.0
      %640 = vmatprep.subr.mxu0 0.0
      %641 = vmatpush2.xpose.msra.mxu0 0.0
      %642 = vmatprep.subr.mxu0 0.0
      %643 = vmatpush2.xpose.msra.mxu0 0.0
      %644 = vmatprep.subr.mxu0 0.0
      %645 = vmatpush2.xpose.msra.mxu0 0.0
      %646 = vmatprep.subr.mxu0 0.0
      %647 = vmatpush2.xpose.msra.mxu0 0.0
      %648 = vmatprep.subr.mxu0 0.0
      %649 = vmatpush2.xpose.msra.mxu0 0.0
      %650 = vmatprep.subr.mxu0 0.0
      %651 = vmatpush2.xpose.msra.mxu0 0.0
      %652 = vmatprep.mubr.f32.mxu0 0.0
      %653 = vmatmul.mubr.f32.gmra.mxu0 %v584
      %v654 = vpop.f32.mrf.mxu0
      %v655 = vadd.f32 %v577, %v654
      %v656 = vpop.f32.mrf.mxu0
      %657 = vdwg.mxu0
      %v658 = vsel %vm582, %v655, -inf
      %659 = vmax.xlane.f32.xlu0 %v658
      %v660 = vpop.xlane.xlu0 %659
      %v661 = vsub.f32 %v655, %v660
      %v662 = vmul.f32 %v661, 1.442695
      %v663 = vpow.pop %v662
      %v664 = vsel %vm582, %v663, 0.0
      %665 = vadd.xlane.f32.xlu0 %v664
      %v666 = vpop.xlane.xlu0 %665
      %667 = vrot.lane.b32.xlu0 %v561, 64
      %v668 = vpop.permute.xlu0 %667
      %v671 = vsel %vm582, %v663, 0
      %673 = vmatprep.subr.mxu0 0.0
      %674 = vmatpush1.msra.mxu0 0.0
      %675 = vmatprep.subr.mxu0 0.0
      %676 = vmatpush1.msra.mxu0 0.0
      %677 = vmatprep.subr.mxu0 0.0
      %678 = vmatpush1.msra.mxu0 0.0
      %679 = vmatprep.subr.mxu0 0.0
      %680 = vmatpush1.msra.mxu0 0.0
      %681 = vmatprep.subr.mxu0 0.0
      %682 = vmatpush1.msra.mxu0 0.0
      %683 = vmatprep.subr.mxu0 0.0
      %684 = vmatpush1.msra.mxu0 0.0
      %685 = vmatprep.subr.mxu0 0.0
      %686 = vmatpush1.msra.mxu0 0.0
      %687 = vmatprep.subr.mxu0 0.0
      %688 = vmatpush1.msra.mxu0 0.0
      %689 = vmatprep.subr.mxu0 0.0
      %690 = vmatpush1.msra.mxu0 0.0
      %691 = vmatprep.subr.mxu0 0.0
      %692 = vmatpush1.msra.mxu0 0.0
      %693 = vmatprep.subr.mxu0 0.0
      %694 = vmatpush1.msra.mxu0 0.0
      %695 = vmatprep.subr.mxu0 0.0
      %696 = vmatpush1.msra.mxu0 0.0
      %697 = vmatprep.subr.mxu0 0.0
      %698 = vmatpush1.msra.mxu0 0.0
      %699 = vmatprep.subr.mxu0 0.0
      %700 = vmatpush1.msra.mxu0 0.0
      %701 = vmatprep.subr.mxu0 0.0
      %702 = vmatpush1.msra.mxu0 0.0
      %703 = vmatprep.subr.mxu0 0.0
      %704 = vmatpush1.msra.mxu0 %v668
      %705 = vmatprep.subr.mxu0 0.0
      %706 = vmatpush2.msra.mxu0 0.0
      %707 = vmatprep.subr.mxu0 0.0
      %708 = vmatpush2.msra.mxu0 0.0
      %709 = vmatprep.subr.mxu0 0.0
      %710 = vmatpush2.msra.mxu0 0.0
      %711 = vmatprep.subr.mxu0 0.0
      %712 = vmatpush2.msra.mxu0 0.0
      %713 = vmatprep.subr.mxu0 0.0
      %714 = vmatpush2.msra.mxu0 0.0
      %715 = vmatprep.subr.mxu0 0.0
      %716 = vmatpush2.msra.mxu0 0.0
      %717 = vmatprep.subr.mxu0 0.0
      %718 = vmatpush2.msra.mxu0 0.0
      %719 = vmatprep.subr.mxu0 0.0
      %720 = vmatpush2.msra.mxu0 0.0
      %721 = vmatprep.subr.mxu0 0.0
      %722 = vmatpush2.msra.mxu0 0.0
      %723 = vmatprep.subr.mxu0 0.0
      %724 = vmatpush2.msra.mxu0 0.0
      %725 = vmatprep.subr.mxu0 0.0
      %726 = vmatpush2.msra.mxu0 0.0
      %727 = vmatprep.subr.mxu0 0.0
      %728 = vmatpush2.msra.mxu0 0.0
      %729 = vmatprep.subr.mxu0 0.0
      %730 = vmatpush2.msra.mxu0 0.0
      %731 = vmatprep.subr.mxu0 0.0
      %732 = vmatpush2.msra.mxu0 0.0
      %733 = vmatprep.subr.mxu0 0.0
      %734 = vmatpush2.msra.mxu0 0.0
      %735 = vmatprep.subr.mxu0 0.0
      %736 = vmatpush2.msra.mxu0 0.0
      %737 = vmatprep.mubr.f32.mxu0 0.0
      %738 = vmatmul.mubr.f32.gmra.mxu0 %v671
      %v739 = vpop.f32.mrf.mxu0
      %v740 = vadd.f32 0.0, %v739
      %v741 = vpop.f32.mrf.mxu0
      %742 = vdwg.mxu0
      %v743 = vrcp.pop %v666
      %v744 = vmul.f32 %v740, %v743
      %v745 = vld [vmem:[%s4] sm:$0xff]
      %v747 = vsel %vm582, %v744, 0
      %749 = vmatprep.subr.mxu0 0.0
      %750 = vmatpush1.msra.mxu0 0.0
      %751 = vmatprep.subr.mxu0 0.0
      %752 = vmatpush1.msra.mxu0 0.0
      %753 = vmatprep.subr.mxu0 0.0
      %754 = vmatpush1.msra.mxu0 0.0
      %755 = vmatprep.subr.mxu0 0.0
      %756 = vmatpush1.msra.mxu0 0.0
      %757 = vmatprep.subr.mxu0 0.0
      %758 = vmatpush1.msra.mxu0 0.0
      %759 = vmatprep.subr.mxu0 0.0
      %760 = vmatpush1.msra.mxu0 0.0
      %761 = vmatprep.subr.mxu0 0.0
      %762 = vmatpush1.msra.mxu0 0.0
      %763 = vmatprep.subr.mxu0 0.0
      %764 = vmatpush1.msra.mxu0 0.0
      %765 = vmatprep.subr.mxu0 0.0
      %766 = vmatpush1.msra.mxu0 0.0
      %767 = vmatprep.subr.mxu0 0.0
      %768 = vmatpush1.msra.mxu0 0.0
      %769 = vmatprep.subr.mxu0 0.0
      %770 = vmatpush1.msra.mxu0 0.0
      %771 = vmatprep.subr.mxu0 0.0
      %772 = vmatpush1.msra.mxu0 0.0
      %773 = vmatprep.subr.mxu0 0.0
      %774 = vmatpush1.msra.mxu0 0.0
      %775 = vmatprep.subr.mxu0 0.0
      %776 = vmatpush1.msra.mxu0 0.0
      %777 = vmatprep.subr.mxu0 0.0
      %778 = vmatpush1.msra.mxu0 0.0
      %779 = vmatprep.subr.mxu0 0.0
      %780 = vmatpush1.msra.mxu0 %v745
      %781 = vmatprep.subr.mxu0 0.0
      %782 = vmatpush2.msra.mxu0 0.0
      %783 = vmatprep.subr.mxu0 0.0
      %784 = vmatpush2.msra.mxu0 0.0
      %785 = vmatprep.subr.mxu0 0.0
      %786 = vmatpush2.msra.mxu0 0.0
      %787 = vmatprep.subr.mxu0 0.0
      %788 = vmatpush2.msra.mxu0 0.0
      %789 = vmatprep.subr.mxu0 0.0
      %790 = vmatpush2.msra.mxu0 0.0
      %791 = vmatprep.subr.mxu0 0.0
      %792 = vmatpush2.msra.mxu0 0.0
      %793 = vmatprep.subr.mxu0 0.0
      %794 = vmatpush2.msra.mxu0 0.0
      %795 = vmatprep.subr.mxu0 0.0
      %796 = vmatpush2.msra.mxu0 0.0
      %797 = vmatprep.subr.mxu0 0.0
      %798 = vmatpush2.msra.mxu0 0.0
      %799 = vmatprep.subr.mxu0 0.0
      %800 = vmatpush2.msra.mxu0 0.0
      %801 = vmatprep.subr.mxu0 0.0
      %802 = vmatpush2.msra.mxu0 0.0
      %803 = vmatprep.subr.mxu0 0.0
      %804 = vmatpush2.msra.mxu0 0.0
      %805 = vmatprep.subr.mxu0 0.0
      %806 = vmatpush2.msra.mxu0 0.0
      %807 = vmatprep.subr.mxu0 0.0
      %808 = vmatpush2.msra.mxu0 0.0
      %809 = vmatprep.subr.mxu0 0.0
      %810 = vmatpush2.msra.mxu0 0.0
      %811 = vmatprep.subr.mxu0 0.0
      %812 = vmatpush2.msra.mxu0 0.0
      %813 = vmatprep.mubr.f32.mxu0 0.0
      %814 = vmatmul.mubr.f32.gmra.mxu0 %v747
      %v815 = vpop.f32.mrf.mxu0
      %v816 = vadd.f32 0.0, %v815
      %v817 = vpop.f32.mrf.mxu0
      %818 = vdwg.mxu0
      %v819 = vadd.f32 %v571, %v816
      %820 = vrot.lane.b32.xlu0 %v572, 120
      %v821 = vpop.permute.xlu0 %820
      %822 = vrot.lane.b32.xlu0 %v561, 88
      %v823 = vpop.permute.xlu0 %822
      %v824 = vsel %vm582, %v821, 0
      %v826 = vsel %vm582, %v823, 0
      %828 = vmatprep.subr.mxu0 0.0
      %829 = vmatpush1.xpose.msra.mxu0 0.0
      %830 = vmatprep.subr.mxu0 0.0
      %831 = vmatpush1.xpose.msra.mxu0 0.0
      %832 = vmatprep.subr.mxu0 0.0
      %833 = vmatpush1.xpose.msra.mxu0 0.0
      %834 = vmatprep.subr.mxu0 0.0
      %835 = vmatpush1.xpose.msra.mxu0 0.0
      %836 = vmatprep.subr.mxu0 0.0
      %837 = vmatpush1.xpose.msra.mxu0 0.0
      %838 = vmatprep.subr.mxu0 0.0
      %839 = vmatpush1.xpose.msra.mxu0 0.0
      %840 = vmatprep.subr.mxu0 0.0
      %841 = vmatpush1.xpose.msra.mxu0 0.0
      %842 = vmatprep.subr.mxu0 0.0
      %843 = vmatpush1.xpose.msra.mxu0 0.0
      %844 = vmatprep.subr.mxu0 0.0
      %845 = vmatpush1.xpose.msra.mxu0 0.0
      %846 = vmatprep.subr.mxu0 0.0
      %847 = vmatpush1.xpose.msra.mxu0 0.0
      %848 = vmatprep.subr.mxu0 0.0
      %849 = vmatpush1.xpose.msra.mxu0 0.0
      %850 = vmatprep.subr.mxu0 0.0
      %851 = vmatpush1.xpose.msra.mxu0 0.0
      %852 = vmatprep.subr.mxu0 0.0
      %853 = vmatpush1.xpose.msra.mxu0 0.0
      %854 = vmatprep.subr.mxu0 0.0
      %855 = vmatpush1.xpose.msra.mxu0 0.0
      %856 = vmatprep.subr.mxu0 0.0
      %857 = vmatpush1.xpose.msra.mxu0 0.0
      %858 = vmatprep.subr.mxu0 0.0
      %859 = vmatpush1.xpose.msra.mxu0 %v826
      %860 = vmatprep.subr.mxu0 0.0
      %861 = vmatpush2.xpose.msra.mxu0 0.0
      %862 = vmatprep.subr.mxu0 0.0
      %863 = vmatpush2.xpose.msra.mxu0 0.0
      %864 = vmatprep.subr.mxu0 0.0
      %865 = vmatpush2.xpose.msra.mxu0 0.0
      %866 = vmatprep.subr.mxu0 0.0
      %867 = vmatpush2.xpose.msra.mxu0 0.0
      %868 = vmatprep.subr.mxu0 0.0
      %869 = vmatpush2.xpose.msra.mxu0 0.0
      %870 = vmatprep.subr.mxu0 0.0
      %871 = vmatpush2.xpose.msra.mxu0 0.0
      %872 = vmatprep.subr.mxu0 0.0
      %873 = vmatpush2.xpose.msra.mxu0 0.0
      %874 = vmatprep.subr.mxu0 0.0
      %875 = vmatpush2.xpose.msra.mxu0 0.0
      %876 = vmatprep.subr.mxu0 0.0
      %877 = vmatpush2.xpose.msra.mxu0 0.0
      %878 = vmatprep.subr.mxu0 0.0
      %879 = vmatpush2.xpose.msra.mxu0 0.0
      %880 = vmatprep.subr.mxu0 0.0
      %881 = vmatpush2.xpose.msra.mxu0 0.0
      %882 = vmatprep.subr.mxu0 0.0
      %883 = vmatpush2.xpose.msra.mxu0 0.0
      %884 = vmatprep.subr.mxu0 0.0
      %885 = vmatpush2.xpose.msra.mxu0 0.0
      %886 = vmatprep.subr.mxu0 0.0
      %887 = vmatpush2.xpose.msra.mxu0 0.0
      %888 = vmatprep.subr.mxu0 0.0
      %889 = vmatpush2.xpose.msra.mxu0 0.0
      %890 = vmatprep.subr.mxu0 0.0
      %891 = vmatpush2.xpose.msra.mxu0 0.0
      %892 = vmatprep.mubr.f32.mxu0 0.0
      %893 = vmatmul.mubr.f32.gmra.mxu0 %v824
      %v894 = vpop.f32.mrf.mxu0
      %v895 = vadd.f32 %v577, %v894
      %v896 = vpop.f32.mrf.mxu0
      %897 = vdwg.mxu0
      %v898 = vsel %vm582, %v895, -inf
      %899 = vmax.xlane.f32.xlu0 %v898
      %v900 = vpop.xlane.xlu0 %899
      %v901 = vsub.f32 %v895, %v900
      %v902 = vmul.f32 %v901, 1.442695
      %v903 = vpow.pop %v902
      %v904 = vsel %vm582, %v903, 0.0
      %905 = vadd.xlane.f32.xlu0 %v904
      %v906 = vpop.xlane.xlu0 %905
      %907 = vrot.lane.b32.xlu0 %v561, 56
      %v908 = vpop.permute.xlu0 %907
      %v911 = vsel %vm582, %v903, 0
      %913 = vmatprep.subr.mxu0 0.0
      %914 = vmatpush1.msra.mxu0 0.0
      %915 = vmatprep.subr.mxu0 0.0
      %916 = vmatpush1.msra.mxu0 0.0
      %917 = vmatprep.subr.mxu0 0.0
      %918 = vmatpush1.msra.mxu0 0.0
      %919 = vmatprep.subr.mxu0 0.0
      %920 = vmatpush1.msra.mxu0 0.0
      %921 = vmatprep.subr.mxu0 0.0
      %922 = vmatpush1.msra.mxu0 0.0
      %923 = vmatprep.subr.mxu0 0.0
      %924 = vmatpush1.msra.mxu0 0.0
      %925 = vmatprep.subr.mxu0 0.0
      %926 = vmatpush1.msra.mxu0 0.0
      %927 = vmatprep.subr.mxu0 0.0
      %928 = vmatpush1.msra.mxu0 0.0
      %929 = vmatprep.subr.mxu0 0.0
      %930 = vmatpush1.msra.mxu0 0.0
      %931 = vmatprep.subr.mxu0 0.0
      %932 = vmatpush1.msra.mxu0 0.0
      %933 = vmatprep.subr.mxu0 0.0
      %934 = vmatpush1.msra.mxu0 0.0
      %935 = vmatprep.subr.mxu0 0.0
      %936 = vmatpush1.msra.mxu0 0.0
      %937 = vmatprep.subr.mxu0 0.0
      %938 = vmatpush1.msra.mxu0 0.0
      %939 = vmatprep.subr.mxu0 0.0
      %940 = vmatpush1.msra.mxu0 0.0
      %941 = vmatprep.subr.mxu0 0.0
      %942 = vmatpush1.msra.mxu0 0.0
      %943 = vmatprep.subr.mxu0 0.0
      %944 = vmatpush1.msra.mxu0 %v908
      %945 = vmatprep.subr.mxu0 0.0
      %946 = vmatpush2.msra.mxu0 0.0
      %947 = vmatprep.subr.mxu0 0.0
      %948 = vmatpush2.msra.mxu0 0.0
      %949 = vmatprep.subr.mxu0 0.0
      %950 = vmatpush2.msra.mxu0 0.0
      %951 = vmatprep.subr.mxu0 0.0
      %952 = vmatpush2.msra.mxu0 0.0
      %953 = vmatprep.subr.mxu0 0.0
      %954 = vmatpush2.msra.mxu0 0.0
      %955 = vmatprep.subr.mxu0 0.0
      %956 = vmatpush2.msra.mxu0 0.0
      %957 = vmatprep.subr.mxu0 0.0
      %958 = vmatpush2.msra.mxu0 0.0
      %959 = vmatprep.subr.mxu0 0.0
      %960 = vmatpush2.msra.mxu0 0.0
      %961 = vmatprep.subr.mxu0 0.0
      %962 = vmatpush2.msra.mxu0 0.0
      %963 = vmatprep.subr.mxu0 0.0
      %964 = vmatpush2.msra.mxu0 0.0
      %965 = vmatprep.subr.mxu0 0.0
      %966 = vmatpush2.msra.mxu0 0.0
      %967 = vmatprep.subr.mxu0 0.0
      %968 = vmatpush2.msra.mxu0 0.0
      %969 = vmatprep.subr.mxu0 0.0
      %970 = vmatpush2.msra.mxu0 0.0
      %971 = vmatprep.subr.mxu0 0.0
      %972 = vmatpush2.msra.mxu0 0.0
      %973 = vmatprep.subr.mxu0 0.0
      %974 = vmatpush2.msra.mxu0 0.0
      %975 = vmatprep.subr.mxu0 0.0
      %976 = vmatpush2.msra.mxu0 0.0
      %977 = vmatprep.mubr.f32.mxu0 0.0
      %978 = vmatmul.mubr.f32.gmra.mxu0 %v911
      %v979 = vpop.f32.mrf.mxu0
      %v980 = vadd.f32 0.0, %v979
      %v981 = vpop.f32.mrf.mxu0
      %982 = vdwg.mxu0
      %v983 = vrcp.pop %v906
      %v984 = vmul.f32 %v980, %v983
      %v985 = vld [vmem:[%s4 + $0x8] sm:$0xff]
      %v987 = vsel %vm582, %v984, 0
      %989 = vmatprep.subr.mxu0 0.0
      %990 = vmatpush1.msra.mxu0 0.0
      %991 = vmatprep.subr.mxu0 0.0
      %992 = vmatpush1.msra.mxu0 0.0
      %993 = vmatprep.subr.mxu0 0.0
      %994 = vmatpush1.msra.mxu0 0.0
      %995 = vmatprep.subr.mxu0 0.0
      %996 = vmatpush1.msra.mxu0 0.0
      %997 = vmatprep.subr.mxu0 0.0
      %998 = vmatpush1.msra.mxu0 0.0
      %999 = vmatprep.subr.mxu0 0.0
      %1000 = vmatpush1.msra.mxu0 0.0
      %1001 = vmatprep.subr.mxu0 0.0
      %1002 = vmatpush1.msra.mxu0 0.0
      %1003 = vmatprep.subr.mxu0 0.0
      %1004 = vmatpush1.msra.mxu0 0.0
      %1005 = vmatprep.subr.mxu0 0.0
      %1006 = vmatpush1.msra.mxu0 0.0
      %1007 = vmatprep.subr.mxu0 0.0
      %1008 = vmatpush1.msra.mxu0 0.0
      %1009 = vmatprep.subr.mxu0 0.0
      %1010 = vmatpush1.msra.mxu0 0.0
      %1011 = vmatprep.subr.mxu0 0.0
      %1012 = vmatpush1.msra.mxu0 0.0
      %1013 = vmatprep.subr.mxu0 0.0
      %1014 = vmatpush1.msra.mxu0 0.0
      %1015 = vmatprep.subr.mxu0 0.0
      %1016 = vmatpush1.msra.mxu0 0.0
      %1017 = vmatprep.subr.mxu0 0.0
      %1018 = vmatpush1.msra.mxu0 0.0
      %1019 = vmatprep.subr.mxu0 0.0
      %1020 = vmatpush1.msra.mxu0 %v985
      %1021 = vmatprep.subr.mxu0 0.0
      %1022 = vmatpush2.msra.mxu0 0.0
      %1023 = vmatprep.subr.mxu0 0.0
      %1024 = vmatpush2.msra.mxu0 0.0
      %1025 = vmatprep.subr.mxu0 0.0
      %1026 = vmatpush2.msra.mxu0 0.0
      %1027 = vmatprep.subr.mxu0 0.0
      %1028 = vmatpush2.msra.mxu0 0.0
      %1029 = vmatprep.subr.mxu0 0.0
      %1030 = vmatpush2.msra.mxu0 0.0
      %1031 = vmatprep.subr.mxu0 0.0
      %1032 = vmatpush2.msra.mxu0 0.0
      %1033 = vmatprep.subr.mxu0 0.0
      %1034 = vmatpush2.msra.mxu0 0.0
      %1035 = vmatprep.subr.mxu0 0.0
      %1036 = vmatpush2.msra.mxu0 0.0
      %1037 = vmatprep.subr.mxu0 0.0
      %1038 = vmatpush2.msra.mxu0 0.0
      %1039 = vmatprep.subr.mxu0 0.0
      %1040 = vmatpush2.msra.mxu0 0.0
      %1041 = vmatprep.subr.mxu0 0.0
      %1042 = vmatpush2.msra.mxu0 0.0
      %1043 = vmatprep.subr.mxu0 0.0
      %1044 = vmatpush2.msra.mxu0 0.0
      %1045 = vmatprep.subr.mxu0 0.0
      %1046 = vmatpush2.msra.mxu0 0.0
      %1047 = vmatprep.subr.mxu0 0.0
      %1048 = vmatpush2.msra.mxu0 0.0
      %1049 = vmatprep.subr.mxu0 0.0
      %1050 = vmatpush2.msra.mxu0 0.0
      %1051 = vmatprep.subr.mxu0 0.0
      %1052 = vmatpush2.msra.mxu0 0.0
      %1053 = vmatprep.mubr.f32.mxu0 0.0
      %1054 = vmatmul.mubr.f32.gmra.mxu0 %v987
      %v1055 = vpop.f32.mrf.mxu0
      %v1056 = vadd.f32 0.0, %v1055
      %v1057 = vpop.f32.mrf.mxu0
      %1058 = vdwg.mxu0
      %v1059 = vadd.f32 %v819, %v1056
      %1060 = vrot.lane.b32.xlu0 %v572, 112
      %v1061 = vpop.permute.xlu0 %1060
      %1062 = vrot.lane.b32.xlu0 %v561, 80
      %v1063 = vpop.permute.xlu0 %1062
      %v1064 = vsel %vm582, %v1061, 0
      %v1066 = vsel %vm582, %v1063, 0
      %1068 = vmatprep.subr.mxu0 0.0
      %1069 = vmatpush1.xpose.msra.mxu0 0.0
      %1070 = vmatprep.subr.mxu0 0.0
      %1071 = vmatpush1.xpose.msra.mxu0 0.0
      %1072 = vmatprep.subr.mxu0 0.0
      %1073 = vmatpush1.xpose.msra.mxu0 0.0
      %1074 = vmatprep.subr.mxu0 0.0
      %1075 = vmatpush1.xpose.msra.mxu0 0.0
      %1076 = vmatprep.subr.mxu0 0.0
      %1077 = vmatpush1.xpose.msra.mxu0 0.0
      %1078 = vmatprep.subr.mxu0 0.0
      %1079 = vmatpush1.xpose.msra.mxu0 0.0
      %1080 = vmatprep.subr.mxu0 0.0
      %1081 = vmatpush1.xpose.msra.mxu0 0.0
      %1082 = vmatprep.subr.mxu0 0.0
      %1083 = vmatpush1.xpose.msra.mxu0 0.0
      %1084 = vmatprep.subr.mxu0 0.0
      %1085 = vmatpush1.xpose.msra.mxu0 0.0
      %1086 = vmatprep.subr.mxu0 0.0
      %1087 = vmatpush1.xpose.msra.mxu0 0.0
      %1088 = vmatprep.subr.mxu0 0.0
      %1089 = vmatpush1.xpose.msra.mxu0 0.0
      %1090 = vmatprep.subr.mxu0 0.0
      %1091 = vmatpush1.xpose.msra.mxu0 0.0
      %1092 = vmatprep.subr.mxu0 0.0
      %1093 = vmatpush1.xpose.msra.mxu0 0.0
      %1094 = vmatprep.subr.mxu0 0.0
      %1095 = vmatpush1.xpose.msra.mxu0 0.0
      %1096 = vmatprep.subr.mxu0 0.0
      %1097 = vmatpush1.xpose.msra.mxu0 0.0
      %1098 = vmatprep.subr.mxu0 0.0
      %1099 = vmatpush1.xpose.msra.mxu0 %v1066
      %1100 = vmatprep.subr.mxu0 0.0
      %1101 = vmatpush2.xpose.msra.mxu0 0.0
      %1102 = vmatprep.subr.mxu0 0.0
      %1103 = vmatpush2.xpose.msra.mxu0 0.0
      %1104 = vmatprep.subr.mxu0 0.0
      %1105 = vmatpush2.xpose.msra.mxu0 0.0
      %1106 = vmatprep.subr.mxu0 0.0
      %1107 = vmatpush2.xpose.msra.mxu0 0.0
      %1108 = vmatprep.subr.mxu0 0.0
      %1109 = vmatpush2.xpose.msra.mxu0 0.0
      %1110 = vmatprep.subr.mxu0 0.0
      %1111 = vmatpush2.xpose.msra.mxu0 0.0
      %1112 = vmatprep.subr.mxu0 0.0
      %1113 = vmatpush2.xpose.msra.mxu0 0.0
      %1114 = vmatprep.subr.mxu0 0.0
      %1115 = vmatpush2.xpose.msra.mxu0 0.0
      %1116 = vmatprep.subr.mxu0 0.0
      %1117 = vmatpush2.xpose.msra.mxu0 0.0
      %1118 = vmatprep.subr.mxu0 0.0
      %1119 = vmatpush2.xpose.msra.mxu0 0.0
      %1120 = vmatprep.subr.mxu0 0.0
      %1121 = vmatpush2.xpose.msra.mxu0 0.0
      %1122 = vmatprep.subr.mxu0 0.0
      %1123 = vmatpush2.xpose.msra.mxu0 0.0
      %1124 = vmatprep.subr.mxu0 0.0
      %1125 = vmatpush2.xpose.msra.mxu0 0.0
      %1126 = vmatprep.subr.mxu0 0.0
      %1127 = vmatpush2.xpose.msra.mxu0 0.0
      %1128 = vmatprep.subr.mxu0 0.0
      %1129 = vmatpush2.xpose.msra.mxu0 0.0
      %1130 = vmatprep.subr.mxu0 0.0
      %1131 = vmatpush2.xpose.msra.mxu0 0.0
      %1132 = vmatprep.mubr.f32.mxu0 0.0
      %1133 = vmatmul.mubr.f32.gmra.mxu0 %v1064
      %v1134 = vpop.f32.mrf.mxu0
      %v1135 = vadd.f32 %v577, %v1134
      %v1136 = vpop.f32.mrf.mxu0
      %1137 = vdwg.mxu0
      %v1138 = vsel %vm582, %v1135, -inf
      %1139 = vmax.xlane.f32.xlu0 %v1138
      %v1140 = vpop.xlane.xlu0 %1139
      %v1141 = vsub.f32 %v1135, %v1140
      %v1142 = vmul.f32 %v1141, 1.442695
      %v1143 = vpow.pop %v1142
      %v1144 = vsel %vm582, %v1143, 0.0
      %1145 = vadd.xlane.f32.xlu0 %v1144
      %v1146 = vpop.xlane.xlu0 %1145
      %1147 = vrot.lane.b32.xlu0 %v561, 48
      %v1148 = vpop.permute.xlu0 %1147
      %v1151 = vsel %vm582, %v1143, 0
      %1153 = vmatprep.subr.mxu0 0.0
      %1154 = vmatpush1.msra.mxu0 0.0
      %1155 = vmatprep.subr.mxu0 0.0
      %1156 = vmatpush1.msra.mxu0 0.0
      %1157 = vmatprep.subr.mxu0 0.0
      %1158 = vmatpush1.msra.mxu0 0.0
      %1159 = vmatprep.subr.mxu0 0.0
      %1160 = vmatpush1.msra.mxu0 0.0
      %1161 = vmatprep.subr.mxu0 0.0
      %1162 = vmatpush1.msra.mxu0 0.0
      %1163 = vmatprep.subr.mxu0 0.0
      %1164 = vmatpush1.msra.mxu0 0.0
      %1165 = vmatprep.subr.mxu0 0.0
      %1166 = vmatpush1.msra.mxu0 0.0
      %1167 = vmatprep.subr.mxu0 0.0
      %1168 = vmatpush1.msra.mxu0 0.0
      %1169 = vmatprep.subr.mxu0 0.0
      %1170 = vmatpush1.msra.mxu0 0.0
      %1171 = vmatprep.subr.mxu0 0.0
      %1172 = vmatpush1.msra.mxu0 0.0
      %1173 = vmatprep.subr.mxu0 0.0
      %1174 = vmatpush1.msra.mxu0 0.0
      %1175 = vmatprep.subr.mxu0 0.0
      %1176 = vmatpush1.msra.mxu0 0.0
      %1177 = vmatprep.subr.mxu0 0.0
      %1178 = vmatpush1.msra.mxu0 0.0
      %1179 = vmatprep.subr.mxu0 0.0
      %1180 = vmatpush1.msra.mxu0 0.0
      %1181 = vmatprep.subr.mxu0 0.0
      %1182 = vmatpush1.msra.mxu0 0.0
      %1183 = vmatprep.subr.mxu0 0.0
      %1184 = vmatpush1.msra.mxu0 %v1148
      %1185 = vmatprep.subr.mxu0 0.0
      %1186 = vmatpush2.msra.mxu0 0.0
      %1187 = vmatprep.subr.mxu0 0.0
      %1188 = vmatpush2.msra.mxu0 0.0
      %1189 = vmatprep.subr.mxu0 0.0
      %1190 = vmatpush2.msra.mxu0 0.0
      %1191 = vmatprep.subr.mxu0 0.0
      %1192 = vmatpush2.msra.mxu0 0.0
      %1193 = vmatprep.subr.mxu0 0.0
      %1194 = vmatpush2.msra.mxu0 0.0
      %1195 = vmatprep.subr.mxu0 0.0
      %1196 = vmatpush2.msra.mxu0 0.0
      %1197 = vmatprep.subr.mxu0 0.0
      %1198 = vmatpush2.msra.mxu0 0.0
      %1199 = vmatprep.subr.mxu0 0.0
      %1200 = vmatpush2.msra.mxu0 0.0
      %1201 = vmatprep.subr.mxu0 0.0
      %1202 = vmatpush2.msra.mxu0 0.0
      %1203 = vmatprep.subr.mxu0 0.0
      %1204 = vmatpush2.msra.mxu0 0.0
      %1205 = vmatprep.subr.mxu0 0.0
      %1206 = vmatpush2.msra.mxu0 0.0
      %1207 = vmatprep.subr.mxu0 0.0
      %1208 = vmatpush2.msra.mxu0 0.0
      %1209 = vmatprep.subr.mxu0 0.0
      %1210 = vmatpush2.msra.mxu0 0.0
      %1211 = vmatprep.subr.mxu0 0.0
      %1212 = vmatpush2.msra.mxu0 0.0
      %1213 = vmatprep.subr.mxu0 0.0
      %1214 = vmatpush2.msra.mxu0 0.0
      %1215 = vmatprep.subr.mxu0 0.0
      %1216 = vmatpush2.msra.mxu0 0.0
      %1217 = vmatprep.mubr.f32.mxu0 0.0
      %1218 = vmatmul.mubr.f32.gmra.mxu0 %v1151
      %v1219 = vpop.f32.mrf.mxu0
      %v1220 = vadd.f32 0.0, %v1219
      %v1221 = vpop.f32.mrf.mxu0
      %1222 = vdwg.mxu0
      %v1223 = vrcp.pop %v1146
      %v1224 = vmul.f32 %v1220, %v1223
      %v1225 = vld [vmem:[%s4 + $0x10] sm:$0xff]
      %v1227 = vsel %vm582, %v1224, 0
      %1229 = vmatprep.subr.mxu0 0.0
      %1230 = vmatpush1.msra.mxu0 0.0
      %1231 = vmatprep.subr.mxu0 0.0
      %1232 = vmatpush1.msra.mxu0 0.0
      %1233 = vmatprep.subr.mxu0 0.0
      %1234 = vmatpush1.msra.mxu0 0.0
      %1235 = vmatprep.subr.mxu0 0.0
      %1236 = vmatpush1.msra.mxu0 0.0
      %1237 = vmatprep.subr.mxu0 0.0
      %1238 = vmatpush1.msra.mxu0 0.0
      %1239 = vmatprep.subr.mxu0 0.0
      %1240 = vmatpush1.msra.mxu0 0.0
      %1241 = vmatprep.subr.mxu0 0.0
      %1242 = vmatpush1.msra.mxu0 0.0
      %1243 = vmatprep.subr.mxu0 0.0
      %1244 = vmatpush1.msra.mxu0 0.0
      %1245 = vmatprep.subr.mxu0 0.0
      %1246 = vmatpush1.msra.mxu0 0.0
      %1247 = vmatprep.subr.mxu0 0.0
      %1248 = vmatpush1.msra.mxu0 0.0
      %1249 = vmatprep.subr.mxu0 0.0
      %1250 = vmatpush1.msra.mxu0 0.0
      %1251 = vmatprep.subr.mxu0 0.0
      %1252 = vmatpush1.msra.mxu0 0.0
      %1253 = vmatprep.subr.mxu0 0.0
      %1254 = vmatpush1.msra.mxu0 0.0
      %1255 = vmatprep.subr.mxu0 0.0
      %1256 = vmatpush1.msra.mxu0 0.0
      %1257 = vmatprep.subr.mxu0 0.0
      %1258 = vmatpush1.msra.mxu0 0.0
      %1259 = vmatprep.subr.mxu0 0.0
      %1260 = vmatpush1.msra.mxu0 %v1225
      %1261 = vmatprep.subr.mxu0 0.0
      %1262 = vmatpush2.msra.mxu0 0.0
      %1263 = vmatprep.subr.mxu0 0.0
      %1264 = vmatpush2.msra.mxu0 0.0
      %1265 = vmatprep.subr.mxu0 0.0
      %1266 = vmatpush2.msra.mxu0 0.0
      %1267 = vmatprep.subr.mxu0 0.0
      %1268 = vmatpush2.msra.mxu0 0.0
      %1269 = vmatprep.subr.mxu0 0.0
      %1270 = vmatpush2.msra.mxu0 0.0
      %1271 = vmatprep.subr.mxu0 0.0
      %1272 = vmatpush2.msra.mxu0 0.0
      %1273 = vmatprep.subr.mxu0 0.0
      %1274 = vmatpush2.msra.mxu0 0.0
      %1275 = vmatprep.subr.mxu0 0.0
      %1276 = vmatpush2.msra.mxu0 0.0
      %1277 = vmatprep.subr.mxu0 0.0
      %1278 = vmatpush2.msra.mxu0 0.0
      %1279 = vmatprep.subr.mxu0 0.0
      %1280 = vmatpush2.msra.mxu0 0.0
      %1281 = vmatprep.subr.mxu0 0.0
      %1282 = vmatpush2.msra.mxu0 0.0
      %1283 = vmatprep.subr.mxu0 0.0
      %1284 = vmatpush2.msra.mxu0 0.0
      %1285 = vmatprep.subr.mxu0 0.0
      %1286 = vmatpush2.msra.mxu0 0.0
      %1287 = vmatprep.subr.mxu0 0.0
      %1288 = vmatpush2.msra.mxu0 0.0
      %1289 = vmatprep.subr.mxu0 0.0
      %1290 = vmatpush2.msra.mxu0 0.0
      %1291 = vmatprep.subr.mxu0 0.0
      %1292 = vmatpush2.msra.mxu0 0.0
      %1293 = vmatprep.mubr.f32.mxu0 0.0
      %1294 = vmatmul.mubr.f32.gmra.mxu0 %v1227
      %v1295 = vpop.f32.mrf.mxu0
      %v1296 = vadd.f32 0.0, %v1295
      %v1297 = vpop.f32.mrf.mxu0
      %1298 = vdwg.mxu0
      %v1299 = vadd.f32 %v1059, %v1296
      %1300 = vrot.lane.b32.xlu0 %v572, 104
      %v1301 = vpop.permute.xlu0 %1300
      %1302 = vrot.lane.b32.xlu0 %v561, 72
      %v1303 = vpop.permute.xlu0 %1302
      %v1304 = vsel %vm582, %v1301, 0
      %v1306 = vsel %vm582, %v1303, 0
      %1308 = vmatprep.subr.mxu0 0.0
      %1309 = vmatpush1.xpose.msra.mxu0 0.0
      %1310 = vmatprep.subr.mxu0 0.0
      %1311 = vmatpush1.xpose.msra.mxu0 0.0
      %1312 = vmatprep.subr.mxu0 0.0
      %1313 = vmatpush1.xpose.msra.mxu0 0.0
      %1314 = vmatprep.subr.mxu0 0.0
      %1315 = vmatpush1.xpose.msra.mxu0 0.0
      %1316 = vmatprep.subr.mxu0 0.0
      %1317 = vmatpush1.xpose.msra.mxu0 0.0
      %1318 = vmatprep.subr.mxu0 0.0
      %1319 = vmatpush1.xpose.msra.mxu0 0.0
      %1320 = vmatprep.subr.mxu0 0.0
      %1321 = vmatpush1.xpose.msra.mxu0 0.0
      %1322 = vmatprep.subr.mxu0 0.0
      %1323 = vmatpush1.xpose.msra.mxu0 0.0
      %1324 = vmatprep.subr.mxu0 0.0
      %1325 = vmatpush1.xpose.msra.mxu0 0.0
      %1326 = vmatprep.subr.mxu0 0.0
      %1327 = vmatpush1.xpose.msra.mxu0 0.0
      %1328 = vmatprep.subr.mxu0 0.0
      %1329 = vmatpush1.xpose.msra.mxu0 0.0
      %1330 = vmatprep.subr.mxu0 0.0
      %1331 = vmatpush1.xpose.msra.mxu0 0.0
      %1332 = vmatprep.subr.mxu0 0.0
      %1333 = vmatpush1.xpose.msra.mxu0 0.0
      %1334 = vmatprep.subr.mxu0 0.0
      %1335 = vmatpush1.xpose.msra.mxu0 0.0
      %1336 = vmatprep.subr.mxu0 0.0
      %1337 = vmatpush1.xpose.msra.mxu0 0.0
      %1338 = vmatprep.subr.mxu0 0.0
      %1339 = vmatpush1.xpose.msra.mxu0 %v1306
      %1340 = vmatprep.subr.mxu0 0.0
      %1341 = vmatpush2.xpose.msra.mxu0 0.0
      %1342 = vmatprep.subr.mxu0 0.0
      %1343 = vmatpush2.xpose.msra.mxu0 0.0
      %1344 = vmatprep.subr.mxu0 0.0
      %1345 = vmatpush2.xpose.msra.mxu0 0.0
      %1346 = vmatprep.subr.mxu0 0.0
      %1347 = vmatpush2.xpose.msra.mxu0 0.0
      %1348 = vmatprep.subr.mxu0 0.0
      %1349 = vmatpush2.xpose.msra.mxu0 0.0
      %1350 = vmatprep.subr.mxu0 0.0
      %1351 = vmatpush2.xpose.msra.mxu0 0.0
      %1352 = vmatprep.subr.mxu0 0.0
      %1353 = vmatpush2.xpose.msra.mxu0 0.0
      %1354 = vmatprep.subr.mxu0 0.0
      %1355 = vmatpush2.xpose.msra.mxu0 0.0
      %1356 = vmatprep.subr.mxu0 0.0
      %1357 = vmatpush2.xpose.msra.mxu0 0.0
      %1358 = vmatprep.subr.mxu0 0.0
      %1359 = vmatpush2.xpose.msra.mxu0 0.0
      %1360 = vmatprep.subr.mxu0 0.0
      %1361 = vmatpush2.xpose.msra.mxu0 0.0
      %1362 = vmatprep.subr.mxu0 0.0
      %1363 = vmatpush2.xpose.msra.mxu0 0.0
      %1364 = vmatprep.subr.mxu0 0.0
      %1365 = vmatpush2.xpose.msra.mxu0 0.0
      %1366 = vmatprep.subr.mxu0 0.0
      %1367 = vmatpush2.xpose.msra.mxu0 0.0
      %1368 = vmatprep.subr.mxu0 0.0
      %1369 = vmatpush2.xpose.msra.mxu0 0.0
      %1370 = vmatprep.subr.mxu0 0.0
      %1371 = vmatpush2.xpose.msra.mxu0 0.0
      %1372 = vmatprep.mubr.f32.mxu0 0.0
      %1373 = vmatmul.mubr.f32.gmra.mxu0 %v1304
      %v1374 = vpop.f32.mrf.mxu0
      %v1375 = vadd.f32 %v577, %v1374
      %v1376 = vpop.f32.mrf.mxu0
      %1377 = vdwg.mxu0
      %v1378 = vsel %vm582, %v1375, -inf
      %1379 = vmax.xlane.f32.xlu0 %v1378
      %v1380 = vpop.xlane.xlu0 %1379
      %v1381 = vsub.f32 %v1375, %v1380
      %v1382 = vmul.f32 %v1381, 1.442695
      %v1383 = vpow.pop %v1382
      %v1384 = vsel %vm582, %v1383, 0.0
      %1385 = vadd.xlane.f32.xlu0 %v1384
      %v1386 = vpop.xlane.xlu0 %1385
      %1387 = vrot.lane.b32.xlu0 %v561, 40
      %v1388 = vpop.permute.xlu0 %1387
      %v1391 = vsel %vm582, %v1383, 0
      %1393 = vmatprep.subr.mxu0 0.0
      %1394 = vmatpush1.msra.mxu0 0.0
      %1395 = vmatprep.subr.mxu0 0.0
      %1396 = vmatpush1.msra.mxu0 0.0
      %1397 = vmatprep.subr.mxu0 0.0
      %1398 = vmatpush1.msra.mxu0 0.0
      %1399 = vmatprep.subr.mxu0 0.0
      %1400 = vmatpush1.msra.mxu0 0.0
      %1401 = vmatprep.subr.mxu0 0.0
      %1402 = vmatpush1.msra.mxu0 0.0
      %1403 = vmatprep.subr.mxu0 0.0
      %1404 = vmatpush1.msra.mxu0 0.0
      %1405 = vmatprep.subr.mxu0 0.0
      %1406 = vmatpush1.msra.mxu0 0.0
      %1407 = vmatprep.subr.mxu0 0.0
      %1408 = vmatpush1.msra.mxu0 0.0
      %1409 = vmatprep.subr.mxu0 0.0
      %1410 = vmatpush1.msra.mxu0 0.0
      %1411 = vmatprep.subr.mxu0 0.0
      %1412 = vmatpush1.msra.mxu0 0.0
      %1413 = vmatprep.subr.mxu0 0.0
      %1414 = vmatpush1.msra.mxu0 0.0
      %1415 = vmatprep.subr.mxu0 0.0
      %1416 = vmatpush1.msra.mxu0 0.0
      %1417 = vmatprep.subr.mxu0 0.0
      %1418 = vmatpush1.msra.mxu0 0.0
      %1419 = vmatprep.subr.mxu0 0.0
      %1420 = vmatpush1.msra.mxu0 0.0
      %1421 = vmatprep.subr.mxu0 0.0
      %1422 = vmatpush1.msra.mxu0 0.0
      %1423 = vmatprep.subr.mxu0 0.0
      %1424 = vmatpush1.msra.mxu0 %v1388
      %1425 = vmatprep.subr.mxu0 0.0
      %1426 = vmatpush2.msra.mxu0 0.0
      %1427 = vmatprep.subr.mxu0 0.0
      %1428 = vmatpush2.msra.mxu0 0.0
      %1429 = vmatprep.subr.mxu0 0.0
      %1430 = vmatpush2.msra.mxu0 0.0
      %1431 = vmatprep.subr.mxu0 0.0
      %1432 = vmatpush2.msra.mxu0 0.0
      %1433 = vmatprep.subr.mxu0 0.0
      %1434 = vmatpush2.msra.mxu0 0.0
      %1435 = vmatprep.subr.mxu0 0.0
      %1436 = vmatpush2.msra.mxu0 0.0
      %1437 = vmatprep.subr.mxu0 0.0
      %1438 = vmatpush2.msra.mxu0 0.0
      %1439 = vmatprep.subr.mxu0 0.0
      %1440 = vmatpush2.msra.mxu0 0.0
      %1441 = vmatprep.subr.mxu0 0.0
      %1442 = vmatpush2.msra.mxu0 0.0
      %1443 = vmatprep.subr.mxu0 0.0
      %1444 = vmatpush2.msra.mxu0 0.0
      %1445 = vmatprep.subr.mxu0 0.0
      %1446 = vmatpush2.msra.mxu0 0.0
      %1447 = vmatprep.subr.mxu0 0.0
      %1448 = vmatpush2.msra.mxu0 0.0
      %1449 = vmatprep.subr.mxu0 0.0
      %1450 = vmatpush2.msra.mxu0 0.0
      %1451 = vmatprep.subr.mxu0 0.0
      %1452 = vmatpush2.msra.mxu0 0.0
      %1453 = vmatprep.subr.mxu0 0.0
      %1454 = vmatpush2.msra.mxu0 0.0
      %1455 = vmatprep.subr.mxu0 0.0
      %1456 = vmatpush2.msra.mxu0 0.0
      %1457 = vmatprep.mubr.f32.mxu0 0.0
      %1458 = vmatmul.mubr.f32.gmra.mxu0 %v1391
      %v1459 = vpop.f32.mrf.mxu0
      %v1460 = vadd.f32 0.0, %v1459
      %v1461 = vpop.f32.mrf.mxu0
      %1462 = vdwg.mxu0
      %v1463 = vrcp.pop %v1386
      %v1464 = vmul.f32 %v1460, %v1463
      %v1465 = vld [vmem:[%s4 + $0x18] sm:$0xff]
      %v1467 = vsel %vm582, %v1464, 0
      %1469 = vmatprep.subr.mxu0 0.0
      %1470 = vmatpush1.msra.mxu0 0.0
      %1471 = vmatprep.subr.mxu0 0.0
      %1472 = vmatpush1.msra.mxu0 0.0
      %1473 = vmatprep.subr.mxu0 0.0
      %1474 = vmatpush1.msra.mxu0 0.0
      %1475 = vmatprep.subr.mxu0 0.0
      %1476 = vmatpush1.msra.mxu0 0.0
      %1477 = vmatprep.subr.mxu0 0.0
      %1478 = vmatpush1.msra.mxu0 0.0
      %1479 = vmatprep.subr.mxu0 0.0
      %1480 = vmatpush1.msra.mxu0 0.0
      %1481 = vmatprep.subr.mxu0 0.0
      %1482 = vmatpush1.msra.mxu0 0.0
      %1483 = vmatprep.subr.mxu0 0.0
      %1484 = vmatpush1.msra.mxu0 0.0
      %1485 = vmatprep.subr.mxu0 0.0
      %1486 = vmatpush1.msra.mxu0 0.0
      %1487 = vmatprep.subr.mxu0 0.0
      %1488 = vmatpush1.msra.mxu0 0.0
      %1489 = vmatprep.subr.mxu0 0.0
      %1490 = vmatpush1.msra.mxu0 0.0
      %1491 = vmatprep.subr.mxu0 0.0
      %1492 = vmatpush1.msra.mxu0 0.0
      %1493 = vmatprep.subr.mxu0 0.0
      %1494 = vmatpush1.msra.mxu0 0.0
      %1495 = vmatprep.subr.mxu0 0.0
      %1496 = vmatpush1.msra.mxu0 0.0
      %1497 = vmatprep.subr.mxu0 0.0
      %1498 = vmatpush1.msra.mxu0 0.0
      %1499 = vmatprep.subr.mxu0 0.0
      %1500 = vmatpush1.msra.mxu0 %v1465
      %1501 = vmatprep.subr.mxu0 0.0
      %1502 = vmatpush2.msra.mxu0 0.0
      %1503 = vmatprep.subr.mxu0 0.0
      %1504 = vmatpush2.msra.mxu0 0.0
      %1505 = vmatprep.subr.mxu0 0.0
      %1506 = vmatpush2.msra.mxu0 0.0
      %1507 = vmatprep.subr.mxu0 0.0
      %1508 = vmatpush2.msra.mxu0 0.0
      %1509 = vmatprep.subr.mxu0 0.0
      %1510 = vmatpush2.msra.mxu0 0.0
      %1511 = vmatprep.subr.mxu0 0.0
      %1512 = vmatpush2.msra.mxu0 0.0
      %1513 = vmatprep.subr.mxu0 0.0
      %1514 = vmatpush2.msra.mxu0 0.0
      %1515 = vmatprep.subr.mxu0 0.0
      %1516 = vmatpush2.msra.mxu0 0.0
      %1517 = vmatprep.subr.mxu0 0.0
      %1518 = vmatpush2.msra.mxu0 0.0
      %1519 = vmatprep.subr.mxu0 0.0
      %1520 = vmatpush2.msra.mxu0 0.0
      %1521 = vmatprep.subr.mxu0 0.0
      %1522 = vmatpush2.msra.mxu0 0.0
      %1523 = vmatprep.subr.mxu0 0.0
      %1524 = vmatpush2.msra.mxu0 0.0
      %1525 = vmatprep.subr.mxu0 0.0
      %1526 = vmatpush2.msra.mxu0 0.0
      %1527 = vmatprep.subr.mxu0 0.0
      %1528 = vmatpush2.msra.mxu0 0.0
      %1529 = vmatprep.subr.mxu0 0.0
      %1530 = vmatpush2.msra.mxu0 0.0
      %1531 = vmatprep.subr.mxu0 0.0
      %1532 = vmatpush2.msra.mxu0 0.0
      %1533 = vmatprep.mubr.f32.mxu0 0.0
      %1534 = vmatmul.mubr.f32.gmra.mxu0 %v1467
      %v1535 = vpop.f32.mrf.mxu0
      %v1536 = vadd.f32 0.0, %v1535
      %v1537 = vpop.f32.mrf.mxu0
      %1538 = vdwg.mxu0
      %v1539 = vadd.f32 %v1299, %v1536
      %v1540 = vld [vmem:[%s6] sm:$0x1]
      %v1541 = vld [vmem:[%s7] sm:$0x1]
      %v1542 = vsel %vm490, %v1539, 0.0
      %1543 = vadd.xlane.f32.xlu0 %v1542
      %v1544 = vpop.xlane.xlu0 %1543
      %v1545 = vrcp.pop 32.0
      %v1546 = vmul.f32 %v1544, %v1545
      %v1547 = vsub.f32 %v1539, %v1546
      %v1548 = vmul.f32 %v1547, %v1547
      %v1549 = vsel %vm490, %v1548, 0.0
      %1550 = vadd.xlane.f32.xlu0 %v1549
      %v1551 = vpop.xlane.xlu0 %1550
      %v1552 = vmul.f32 %v1551, %v1545
      %v1553 = vadd.f32 %v1552, 1e-12
      %v1554 = vrsqrt.pop %v1553
      %v1555 = vmul.f32 %v1547, %v1554
      %v1557 = vlaneseq
      %v1558 = vshrl.u32 %v1557, 7
      %v1559 = vsub.s32 0, %v1558
      %v1560 = vrot.slane %v1540, %v1559
      %v1562 = vmul.f32 %v1555, %v1560
      %v1564 = vlaneseq
      %v1565 = vshrl.u32 %v1564, 7
      %v1566 = vsub.s32 0, %v1565
      %v1567 = vrot.slane %v1541, %v1566
      %v1569 = vadd.f32 %v1562, %v1567
      %v1570 = vld [vmem:[%s8] sm:$0xff]
      %v1571 = vld [vmem:[%s8 + $0x8] sm:$0xff]
      %v1572 = vld [vmem:[%s8 + $0x10] sm:$0xff]
      %v1573 = vld [vmem:[%s8 + $0x18] sm:$0xff]
      %v1574 = vld [vmem:[%s9] sm:$0x1]
      %v1576 = vlaneseq
      %v1577 = vshrl.u32 %v1576, 7
      %v1578 = vsub.s32 0, %v1577
      %v1579 = vrot.slane %v1574, %v1578
      %v1582 = vsel %vm490, %v1569, 0
      %1584 = vmatprep.subr.mxu0 0.0
      %1585 = vmatpush1.msra.mxu0 0.0
      %1586 = vmatprep.subr.mxu0 0.0
      %1587 = vmatpush1.msra.mxu0 0.0
      %1588 = vmatprep.subr.mxu0 0.0
      %1589 = vmatpush1.msra.mxu0 0.0
      %1590 = vmatprep.subr.mxu0 0.0
      %1591 = vmatpush1.msra.mxu0 0.0
      %1592 = vmatprep.subr.mxu0 0.0
      %1593 = vmatpush1.msra.mxu0 0.0
      %1594 = vmatprep.subr.mxu0 0.0
      %1595 = vmatpush1.msra.mxu0 0.0
      %1596 = vmatprep.subr.mxu0 0.0
      %1597 = vmatpush1.msra.mxu0 0.0
      %1598 = vmatprep.subr.mxu0 0.0
      %1599 = vmatpush1.msra.mxu0 0.0
      %1600 = vmatprep.subr.mxu0 0.0
      %1601 = vmatpush1.msra.mxu0 0.0
      %1602 = vmatprep.subr.mxu0 0.0
      %1603 = vmatpush1.msra.mxu0 0.0
      %1604 = vmatprep.subr.mxu0 0.0
      %1605 = vmatpush1.msra.mxu0 0.0
      %1606 = vmatprep.subr.mxu0 0.0
      %1607 = vmatpush1.msra.mxu0 0.0
      %1608 = vmatprep.subr.mxu0 0.0
      %1609 = vmatpush1.msra.mxu0 %v1573
      %1610 = vmatprep.subr.mxu0 0.0
      %1611 = vmatpush1.msra.mxu0 %v1572
      %1612 = vmatprep.subr.mxu0 0.0
      %1613 = vmatpush1.msra.mxu0 %v1571
      %1614 = vmatprep.subr.mxu0 0.0
      %1615 = vmatpush1.msra.mxu0 %v1570
      %1616 = vmatprep.subr.mxu0 0.0
      %1617 = vmatpush2.msra.mxu0 0.0
      %1618 = vmatprep.subr.mxu0 0.0
      %1619 = vmatpush2.msra.mxu0 0.0
      %1620 = vmatprep.subr.mxu0 0.0
      %1621 = vmatpush2.msra.mxu0 0.0
      %1622 = vmatprep.subr.mxu0 0.0
      %1623 = vmatpush2.msra.mxu0 0.0
      %1624 = vmatprep.subr.mxu0 0.0
      %1625 = vmatpush2.msra.mxu0 0.0
      %1626 = vmatprep.subr.mxu0 0.0
      %1627 = vmatpush2.msra.mxu0 0.0
      %1628 = vmatprep.subr.mxu0 0.0
      %1629 = vmatpush2.msra.mxu0 0.0
      %1630 = vmatprep.subr.mxu0 0.0
      %1631 = vmatpush2.msra.mxu0 0.0
      %1632 = vmatprep.subr.mxu0 0.0
      %1633 = vmatpush2.msra.mxu0 0.0
      %1634 = vmatprep.subr.mxu0 0.0
      %1635 = vmatpush2.msra.mxu0 0.0
      %1636 = vmatprep.subr.mxu0 0.0
      %1637 = vmatpush2.msra.mxu0 0.0
      %1638 = vmatprep.subr.mxu0 0.0
      %1639 = vmatpush2.msra.mxu0 0.0
      %1640 = vmatprep.subr.mxu0 0.0
      %1641 = vmatpush2.msra.mxu0 0.0
      %1642 = vmatprep.subr.mxu0 0.0
      %1643 = vmatpush2.msra.mxu0 0.0
      %1644 = vmatprep.subr.mxu0 0.0
      %1645 = vmatpush2.msra.mxu0 0.0
      %1646 = vmatprep.subr.mxu0 0.0
      %1647 = vmatpush2.msra.mxu0 0.0
      %1648 = vmatprep.mubr.f32.mxu0 0.0
      %1649 = vmatmul.mubr.f32.gmra.mxu0 %v1582
      %v1650 = vpop.f32.mrf.mxu0
      %v1651 = vadd.f32 %v1579, %v1650
      %v1652 = vpop.f32.mrf.mxu0
      %1653 = vdwg.mxu0
      %v1654 = vmul.f32 %v1651, 0.5
      %v1655 = vmul.f32 %v1651, 0.044715
      %v1656 = vmul.f32 %v1655, %v1651
      %v1657 = vmul.f32 %v1656, %v1651
      %v1658 = vadd.f32 %v1651, %v1657
      %v1659 = vmul.f32 %v1658, 0.7978846
      %v1660 = vtanh.pop %v1659
      %v1661 = vadd.f32 %v1660, 1.0
      %v1662 = vmul.f32 %v1654, %v1661
      %v1663 = vld [vmem:[%s10] sm:$0xff]
      %v1664 = vld [vmem:[%s10 + $0x8] sm:$0xff]
      %v1665 = vld [vmem:[%s10 + $0x10] sm:$0xff]
      %v1666 = vld [vmem:[%s10 + $0x18] sm:$0xff]
      %v1667 = vld [vmem:[%s10 + $0x20] sm:$0xff]
      %v1668 = vld [vmem:[%s10 + $0x28] sm:$0xff]
      %v1669 = vld [vmem:[%s10 + $0x30] sm:$0xff]
      %v1670 = vld [vmem:[%s10 + $0x38] sm:$0xff]
      %v1671 = vld [vmem:[%s11] sm:$0x1]
      %v1673 = vlaneseq
      %v1674 = vshrl.u32 %v1673, 7
      %v1675 = vsub.s32 0, %v1674
      %v1676 = vrot.slane %v1671, %v1675
      %vm1678 = vcmask 523264
      %v1680 = vsel %vm1678, %v1662, 0
      %1682 = vmatprep.subr.mxu0 0.0
      %1683 = vmatpush1.msra.mxu0 0.0
      %1684 = vmatprep.subr.mxu0 0.0
      %1685 = vmatpush1.msra.mxu0 0.0
      %1686 = vmatprep.subr.mxu0 0.0
      %1687 = vmatpush1.msra.mxu0 0.0
      %1688 = vmatprep.subr.mxu0 0.0
      %1689 = vmatpush1.msra.mxu0 0.0
      %1690 = vmatprep.subr.mxu0 0.0
      %1691 = vmatpush1.msra.mxu0 0.0
      %1692 = vmatprep.subr.mxu0 0.0
      %1693 = vmatpush1.msra.mxu0 0.0
      %1694 = vmatprep.subr.mxu0 0.0
      %1695 = vmatpush1.msra.mxu0 0.0
      %1696 = vmatprep.subr.mxu0 0.0
      %1697 = vmatpush1.msra.mxu0 0.0
      %1698 = vmatprep.subr.mxu0 0.0
      %1699 = vmatpush1.msra.mxu0 %v1670
      %1700 = vmatprep.subr.mxu0 0.0
      %1701 = vmatpush1.msra.mxu0 %v1669
      %1702 = vmatprep.subr.mxu0 0.0
      %1703 = vmatpush1.msra.mxu0 %v1668
      %1704 = vmatprep.subr.mxu0 0.0
      %1705 = vmatpush1.msra.mxu0 %v1667
      %1706 = vmatprep.subr.mxu0 0.0
      %1707 = vmatpush1.msra.mxu0 %v1666
      %1708 = vmatprep.subr.mxu0 0.0
      %1709 = vmatpush1.msra.mxu0 %v1665
      %1710 = vmatprep.subr.mxu0 0.0
      %1711 = vmatpush1.msra.mxu0 %v1664
      %1712 = vmatprep.subr.mxu0 0.0
      %1713 = vmatpush1.msra.mxu0 %v1663
      %1714 = vmatprep.subr.mxu0 0.0
      %1715 = vmatpush2.msra.mxu0 0.0
      %1716 = vmatprep.subr.mxu0 0.0
      %1717 = vmatpush2.msra.mxu0 0.0
      %1718 = vmatprep.subr.mxu0 0.0
      %1719 = vmatpush2.msra.mxu0 0.0
      %1720 = vmatprep.subr.mxu0 0.0
      %1721 = vmatpush2.msra.mxu0 0.0
      %1722 = vmatprep.subr.mxu0 0.0
      %1723 = vmatpush2.msra.mxu0 0.0
      %1724 = vmatprep.subr.mxu0 0.0
      %1725 = vmatpush2.msra.mxu0 0.0
      %1726 = vmatprep.subr.mxu0 0.0
      %1727 = vmatpush2.msra.mxu0 0.0
      %1728 = vmatprep.subr.mxu0 0.0
      %1729 = vmatpush2.msra.mxu0 0.0
      %1730 = vmatprep.subr.mxu0 0.0
      %1731 = vmatpush2.msra.mxu0 0.0
      %1732 = vmatprep.subr.mxu0 0.0
      %1733 = vmatpush2.msra.mxu0 0.0
      %1734 = vmatprep.subr.mxu0 0.0
      %1735 = vmatpush2.msra.mxu0 0.0
      %1736 = vmatprep.subr.mxu0 0.0
      %1737 = vmatpush2.msra.mxu0 0.0
      %1738 = vmatprep.subr.mxu0 0.0
      %1739 = vmatpush2.msra.mxu0 0.0
      %1740 = vmatprep.subr.mxu0 0.0
      %1741 = vmatpush2.msra.mxu0 0.0
      %1742 = vmatprep.subr.mxu0 0.0
      %1743 = vmatpush2.msra.mxu0 0.0
      %1744 = vmatprep.subr.mxu0 0.0
      %1745 = vmatpush2.msra.mxu0 0.0
      %1746 = vmatprep.mubr.f32.mxu0 0.0
      %1747 = vmatmul.mubr.f32.gmra.mxu0 %v1680
      %v1748 = vpop.f32.mrf.mxu0
      %v1749 = vadd.f32 %v1676, %v1748
      %v1750 = vpop.f32.mrf.mxu0
      %1751 = vdwg.mxu0
      %v1752 = vadd.f32 %v1749, %v1569
      %v1753 = vld [vmem:[%s12] sm:$0x1]
      %v1754 = vld [vmem:[%s13] sm:$0x1]
      %v1755 = vsel %vm490, %v1752, 0.0
      %1756 = vadd.xlane.f32.xlu0 %v1755
      %v1757 = vpop.xlane.xlu0 %1756
      %v1758 = vmul.f32 %v1757, %v1545
      %v1759 = vsub.f32 %v1752, %v1758
      %v1760 = vmul.f32 %v1759, %v1759
      %v1761 = vsel %vm490, %v1760, 0.0
      %1762 = vadd.xlane.f32.xlu0 %v1761
      %v1763 = vpop.xlane.xlu0 %1762
      %v1764 = vmul.f32 %v1763, %v1545
      %v1765 = vadd.f32 %v1764, 1e-12
      %v1766 = vrsqrt.pop %v1765
      %v1767 = vmul.f32 %v1759, %v1766
      %v1769 = vlaneseq
      %v1770 = vshrl.u32 %v1769, 7
      %v1771 = vsub.s32 0, %v1770
      %v1772 = vrot.slane %v1753, %v1771
      %v1774 = vmul.f32 %v1767, %v1772
      %v1776 = vlaneseq
      %v1777 = vshrl.u32 %v1776, 7
      %v1778 = vsub.s32 0, %v1777
      %v1779 = vrot.slane %v1754, %v1778
      %v1781 = vadd.f32 %v1774, %v1779
      %1782 = vst.msk [vmem:[%s476] sm:$0xff] %vm490, %v1781
      %p1783 = scmp.lt.s32.totalorder %s25, 1
      %s1784 = scalar_select %p1783, %s25, 1
      %s1785 = smul.addr %s1784, 8
      %s1786 = scalar_lea.vmem %s14, %s1785
      // Predicated region
      $region77: #{bert_base_uncased_forward.5} parent=75 // pred_check
        %p1787 = pneg %p347
      $region78: #{bert_base_uncased_forward.5} parent=75 // pred_check_branch
        %1789 = sbr.rel (%p1787) target = $region80
      $region79: #{bert_base_uncased_forward.5} parent=75 // pred_region
        _
      $region80: #{bert_base_uncased_forward.5} parent=75 // pred_fallthru
        _
    $region76: #{bert_base_uncased_forward.5} parent=5 // pred_fallthru
      _
    %p1790 = scmp.le.s32.totalorder 2, %s20
    // Predicated region
    $region81: #{bert_base_uncased_forward.5} parent=5 // pred_check
      %p1791 = pneg %p1790
    $region82: #{bert_base_uncased_forward.5} parent=5 // pred_check_branch
      %1793 = sbr.rel (%p1791) target = $region84
    $region83: #{bert_base_uncased_forward.5} parent=5 // pred_region
      %s1794 = ssub.s32 %s20, 2
      // Predicated region
      $region85: #{bert_base_uncased_forward.5} parent=83 // pred_check
        %p1795 = pneg %p353
      $region86: #{bert_base_uncased_forward.5} parent=83 // pred_check_branch
        %1797 = sbr.rel (%p1795) target = $region88
      $region87: #{bert_base_uncased_forward.5} parent=83 // pred_region
        %p1798 = scmp.lt.s32.totalorder %s26, 1
        %s1799 = scalar_select %p1798, %s26, 1
        %s1800 = smul.addr %s1799, 8
        %s1801 = scalar_lea.vmem %s14, %s1800
      $region88: #{bert_base_uncased_forward.5} parent=83 // pred_fallthru
        _
    $region84: #{bert_base_uncased_forward.5} parent=5 // pred_fallthru
      _
  $region6: #{bert_base_uncased_forward.5} parent=0 // loop_footer
    %s24 = sadd.s32 1, %s20
  $region7: #{bert_base_uncased_forward.5} parent=0 // loop_footer_branch
    %19 = sbr.rel target = $region3
  $region8: #{bert_base_uncased_forward.5} parent=0 // loop_exit
    _

</llo_original>
